<compile_context>
chip_gen: v7x
topology: tpu7x:2x2x1
jax: 0.10.0
libtpu: 0.0.40
codegen_flags: <defaults>
</compile_context>

<pallas_src>
import jax
import jax.numpy as jnp
from jax.experimental import pallas as pl
from jax.experimental.pallas import tpu as pltpu


def _round_up(n, m):
    return -(-n // m) * m


def first_rnn_forward(data, params):
    """data: (seq, batch, original_input) float32 -> (seq, batch, original_input)."""
    seq, B, D = data.shape
    H = params["wih0"].shape[0]          # hidden = 2 * D

    # ---- wrapper-side weight prep (done once, exact algebra) ----
    # Fold the compression Linear into the layer-0 input projection:
    #   pre0 = (x @ wc.T + bc) @ wih0.T + bih0 + bhh0
    #        =  x @ (wc.T @ wih0.T) + (bc @ wih0.T + bih0 + bhh0)
    w0_fused = params["wc"].T @ params["wih0"].T                          # (D, H)
    b0_fused = (params["bc"][None, :] @ params["wih0"].T
                + (params["bih0"] + params["bhh0"])[None, :])             # (1, H)
    whh0T = params["whh0"].T                                              # (H, H)
    w1a   = params["wih1"].T                                              # (H, H)
    w1b   = params["whh1"].T                                              # (H, H)
    b1    = (params["bih1"] + params["bhh1"])[None, :]                    # (1, H)
    woutT = params["wout"].T                                              # (H, D)
    bout  = params["bout"][None, :]                                       # (1, D)

    # Pack every weight/bias operand into ONE padded f32 slab -> single DMA.
    pieces = [("w0", w0_fused), ("b0", b0_fused), ("whh0", whh0T),
              ("w1a", w1a), ("w1b", w1b), ("b1", b1),
              ("wout", woutT), ("bout", bout)]
    lanes = _round_up(max(p.shape[1] for _, p in pieces), 128)
    offsets, padded, row = {}, [], 0
    for name, a in pieces:
        r = _round_up(a.shape[0], 8)                 # 8-sublane aligned segments
        offsets[name] = row
        padded.append(jnp.pad(a.astype(jnp.float32),
                              ((0, r - a.shape[0]), (0, lanes - a.shape[1]))))
        row += r
    w_slab = jnp.concatenate(padded, axis=0)                              # (row, lanes)

    x2d = data.reshape(seq * B, D).astype(jnp.float32)                    # time-major

    def kernel(x_ref, w_ref, out_ref, pre0_scr):
        # Static slices of the packed slab (offsets are compile-time constants).
        o = offsets
        w0    = w_ref[o["w0"]:o["w0"] + D, :H]
        b0    = w_ref[o["b0"]:o["b0"] + 1, :H]
        whh0  = w_ref[o["whh0"]:o["whh0"] + H, :H]
        w1a_  = w_ref[o["w1a"]:o["w1a"] + H, :H]
        w1b_  = w_ref[o["w1b"]:o["w1b"] + H, :H]
        b1_   = w_ref[o["b1"]:o["b1"] + 1, :H]
        wout  = w_ref[o["wout"]:o["wout"] + H, :D]
        bo    = w_ref[o["bout"]:o["bout"] + 1, :D]

        # Hoisted, non-recurrent input projection for ALL time steps at once,
        # staged in VMEM so per-step slices are plain vector loads.
        pre0_scr[...] = (jnp.dot(x_ref[...], w0,
                                 preferred_element_type=jnp.float32) + b0)

        # --- serial recurrence: only the truly recurrent matmuls remain ---
        h0 = jnp.zeros((B, H), jnp.float32)
        h1 = jnp.zeros((B, H), jnp.float32)
        h1_steps = []
        for t in range(seq):                         # static unroll (seq is tiny)
            a0 = pre0_scr[t * B:(t + 1) * B, :] + jnp.dot(
                h0, whh0, preferred_element_type=jnp.float32)
            h0 = jnp.maximum(a0, 0.0)
            # Layer 1: two back-to-back MXU pushes, no lane concat on the
            # serial path; biases pre-summed in the wrapper.
            a1 = (jnp.dot(h0, w1a_, preferred_element_type=jnp.float32)
                  + jnp.dot(h1, w1b_, preferred_element_type=jnp.float32) + b1_)
            h1 = jnp.maximum(a1, 0.0)
            h1_steps.append(h1)

        # Hoisted output Linear applied once to the whole (seq*B, H) slab,
        # single store of the final result.
        h1_all = jnp.concatenate(h1_steps, axis=0)                        # (seq*B, H)
        out_ref[...] = (jnp.dot(h1_all, wout,
                                preferred_element_type=jnp.float32) + bo)

    vmem = pl.BlockSpec(memory_space=pltpu.MemorySpace.VMEM)  # whole array in VMEM

    out2d = pl.pallas_call(
        kernel,
        out_shape=jax.ShapeDtypeStruct((seq * B, D), jnp.float32),
        in_specs=[vmem, vmem],
        out_specs=vmem,
        scratch_shapes=[pltpu.VMEM((seq * B, H), jnp.float32)],
    )(x2d, w_slab)

    # TODO(synk): further levers per review, intentionally skipped at this toy
    # size / to keep the strict f32 check: bf16 matmul operands (needs a looser
    # tolerance), explicit MXU weight residency (matmul_push_rhs/matmul_pop and
    # MRB in-place accumulate on v7x), a batch-parallel grid axis for v7x's two
    # TensorCores, and padding the output lane dim to a multiple of 128 if D
    # ever scales.
    return out2d.reshape(seq, B, D)


def reference_forward(data, params):
    """Pure-JAX reference mirroring the PyTorch module."""
    comp = jnp.einsum("sbd,cd->sbc", data, params["wc"]) + params["bc"]
    seq, B, _ = data.shape
    H = params["wih0"].shape[0]

    def step(carry, x_t):
        h0, h1 = carry
        h0 = jnp.maximum(x_t @ params["wih0"].T + params["bih0"]
                         + h0 @ params["whh0"].T + params["bhh0"], 0.0)
        h1 = jnp.maximum(h0 @ params["wih1"].T + params["bih1"]
                         + h1 @ params["whh1"].T + params["bhh1"], 0.0)
        return (h0, h1), h1

    init = (jnp.zeros((B, H), jnp.float32), jnp.zeros((B, H), jnp.float32))
    _, outs = jax.lax.scan(step, init, comp)
    return jnp.einsum("sbh,dh->sbd", outs, params["wout"]) + params["bout"]


def init_params(key, original_input):
    """Deterministic parameter init matching nn.Linear / nn.RNN shapes."""
    compressed = original_input // 4
    hidden = 2 * original_input
    ks = jax.random.split(key, 13)

    def u(k, shape, fan_in):
        bound = 1.0 / jnp.sqrt(jnp.float32(fan_in))
        return jax.random.uniform(k, shape, jnp.float32, -bound, bound)

    return {
        "wc":   u(ks[0],  (compressed, original_input), original_input),
        "bc":   u(ks[1],  (compressed,),                original_input),
        "wih0": u(ks[2],  (hidden, compressed),         hidden),
        "whh0": u(ks[3],  (hidden, hidden),             hidden),
        "bih0": u(ks[4],  (hidden,),                    hidden),
        "bhh0": u(ks[5],  (hidden,),                    hidden),
        "wih1": u(ks[6],  (hidden, hidden),             hidden),
        "whh1": u(ks[7],  (hidden, hidden),             hidden),
        "bih1": u(ks[8],  (hidden,),                    hidden),
        "bhh1": u(ks[9],  (hidden,),                    hidden),
        "wout": u(ks[10], (original_input, hidden),     hidden),
        "bout": u(ks[11], (original_input,),            hidden),
    }


if __name__ == "__main__":
    ORIGINAL_INPUT = 16     # -> compressed=4, hidden=32
    SEQ, BATCH = 8, 2

    key = jax.random.PRNGKey(0)
    k_data, k_params = jax.random.split(key)
    data = jax.random.normal(k_data, (SEQ, BATCH, ORIGINAL_INPUT), jnp.float32)
    params = init_params(k_params, ORIGINAL_INPUT)

    out = first_rnn_forward(data, params)
    out = jax.block_until_ready(out)

    ref = reference_forward(data, params)
    assert out.shape == (SEQ, BATCH, ORIGINAL_INPUT)
    assert jnp.allclose(out, ref, atol=1e-4, rtol=1e-4), "mismatch vs reference"

    print("KERNEL_OK")
</pallas_src>

<mosaic_0001>
module attributes {stable_mosaic.version = 11 : i64} {
  func.func @kernel(%arg0: memref<16x16xf32, #tpu.memory_space<vmem>>, %arg1: memref<168x128xf32, #tpu.memory_space<vmem>>, %arg2: memref<16x16xf32, #tpu.memory_space<vmem>>, %arg3: memref<16x32xf32, #tpu.memory_space<vmem>>) attributes {dimension_semantics = [], scalar_prefetch = 0 : i64, scratch_operands = 1 : i64, tpu.core_type = #tpu.core_type<tc>} {
    %c0 = arith.constant 0 : index
    %c0_0 = arith.constant 0 : index
    %0 = vector.load %arg1[%c0, %c0_0] : memref<168x128xf32, #tpu.memory_space<vmem>>, vector<16x32xf32>
    %c16 = arith.constant 16 : index
    %c0_1 = arith.constant 0 : index
    %1 = vector.load %arg1[%c16, %c0_1] : memref<168x128xf32, #tpu.memory_space<vmem>>, vector<1x32xf32>
    %c24 = arith.constant 24 : index
    %c0_2 = arith.constant 0 : index
    %2 = vector.load %arg1[%c24, %c0_2] : memref<168x128xf32, #tpu.memory_space<vmem>>, vector<32x32xf32>
    %c56 = arith.constant 56 : index
    %c0_3 = arith.constant 0 : index
    %3 = vector.load %arg1[%c56, %c0_3] : memref<168x128xf32, #tpu.memory_space<vmem>>, vector<32x32xf32>
    %c88 = arith.constant 88 : index
    %c0_4 = arith.constant 0 : index
    %4 = vector.load %arg1[%c88, %c0_4] : memref<168x128xf32, #tpu.memory_space<vmem>>, vector<32x32xf32>
    %c120 = arith.constant 120 : index
    %c0_5 = arith.constant 0 : index
    %5 = vector.load %arg1[%c120, %c0_5] : memref<168x128xf32, #tpu.memory_space<vmem>>, vector<1x32xf32>
    %c128 = arith.constant 128 : index
    %c0_6 = arith.constant 0 : index
    %6 = vector.load %arg1[%c128, %c0_6] : memref<168x128xf32, #tpu.memory_space<vmem>>, vector<32x16xf32>
    %c160 = arith.constant 160 : index
    %c0_7 = arith.constant 0 : index
    %7 = vector.load %arg1[%c160, %c0_7] : memref<168x128xf32, #tpu.memory_space<vmem>>, vector<1x16xf32>
    %c0_8 = arith.constant 0 : index
    %c0_9 = arith.constant 0 : index
    %8 = vector.load %arg0[%c0_8, %c0_9] : memref<16x16xf32, #tpu.memory_space<vmem>>, vector<16x16xf32>
    %cst = arith.constant dense<0.000000e+00> : vector<16x32xf32>
    %9 = tpu.matmul %8, %0, %cst {dimension_numbers = #tpu.dot_dimension_numbers<[1], [0], [0], [1], [0, 0, 1, 1], [], []>} : vector<16x16xf32>, vector<16x32xf32>, vector<16x32xf32> -> vector<16x32xf32>
    %10 = vector.broadcast %1 : vector<1x32xf32> to vector<16x32xf32>
    %11 = arith.addf %9, %10 : vector<16x32xf32>
    %c0_10 = arith.constant 0 : index
    %c0_11 = arith.constant 0 : index
    %12 = vector.load %arg3[%c0_10, %c0_11] : memref<16x32xf32, #tpu.memory_space<vmem>>, vector<16x32xf32>
    tpu.vector_store %arg3[%c0_10, %c0_11], %11 {strides = array<i32>} : memref<16x32xf32, #tpu.memory_space<vmem>>, vector<16x32xf32>,
    %cst_12 = arith.constant 0.000000e+00 : f32
    %13 = vector.broadcast %cst_12 : f32 to vector<2x32xf32>
    %cst_13 = arith.constant 0.000000e+00 : f32
    %14 = vector.broadcast %cst_13 : f32 to vector<2x32xf32>
    %c0_14 = arith.constant 0 : index
    %c0_15 = arith.constant 0 : index
    %15 = vector.load %arg3[%c0_14, %c0_15] : memref<16x32xf32, #tpu.memory_space<vmem>>, vector<2x32xf32>
    %cst_16 = arith.constant dense<0.000000e+00> : vector<2x32xf32>
    %16 = tpu.matmul %13, %2, %cst_16 {dimension_numbers = #tpu.dot_dimension_numbers<[1], [0], [0], [1], [0, 0, 1, 1], [], []>} : vector<2x32xf32>, vector<32x32xf32>, vector<2x32xf32> -> vector<2x32xf32>
    %17 = arith.addf %15, %16 : vector<2x32xf32>
    %cst_17 = arith.constant 0.000000e+00 : f32
    %18 = vector.broadcast %cst_17 : f32 to vector<2x32xf32>
    %19 = arith.maximumf %17, %18 : vector<2x32xf32>
    %cst_18 = arith.constant dense<0.000000e+00> : vector<2x32xf32>
    %20 = tpu.matmul %19, %3, %cst_18 {dimension_numbers = #tpu.dot_dimension_numbers<[1], [0], [0], [1], [0, 0, 1, 1], [], []>} : vector<2x32xf32>, vector<32x32xf32>, vector<2x32xf32> -> vector<2x32xf32>
    %cst_19 = arith.constant dense<0.000000e+00> : vector<2x32xf32>
    %21 = tpu.matmul %14, %4, %cst_19 {dimension_numbers = #tpu.dot_dimension_numbers<[1], [0], [0], [1], [0, 0, 1, 1], [], []>} : vector<2x32xf32>, vector<32x32xf32>, vector<2x32xf32> -> vector<2x32xf32>
    %22 = arith.addf %20, %21 : vector<2x32xf32>
    %23 = vector.broadcast %5 : vector<1x32xf32> to vector<2x32xf32>
    %24 = arith.addf %22, %23 : vector<2x32xf32>
    %cst_20 = arith.constant 0.000000e+00 : f32
    %25 = vector.broadcast %cst_20 : f32 to vector<2x32xf32>
    %26 = arith.maximumf %24, %25 : vector<2x32xf32>
    %c2 = arith.constant 2 : index
    %c0_21 = arith.constant 0 : index
    %27 = vector.load %arg3[%c2, %c0_21] : memref<16x32xf32, #tpu.memory_space<vmem>>, vector<2x32xf32>
    %cst_22 = arith.constant dense<0.000000e+00> : vector<2x32xf32>
    %28 = tpu.matmul %19, %2, %cst_22 {dimension_numbers = #tpu.dot_dimension_numbers<[1], [0], [0], [1], [0, 0, 1, 1], [], []>} : vector<2x32xf32>, vector<32x32xf32>, vector<2x32xf32> -> vector<2x32xf32>
    %29 = arith.addf %27, %28 : vector<2x32xf32>
    %cst_23 = arith.constant 0.000000e+00 : f32
    %30 = vector.broadcast %cst_23 : f32 to vector<2x32xf32>
    %31 = arith.maximumf %29, %30 : vector<2x32xf32>
    %cst_24 = arith.constant dense<0.000000e+00> : vector<2x32xf32>
    %32 = tpu.matmul %31, %3, %cst_24 {dimension_numbers = #tpu.dot_dimension_numbers<[1], [0], [0], [1], [0, 0, 1, 1], [], []>} : vector<2x32xf32>, vector<32x32xf32>, vector<2x32xf32> -> vector<2x32xf32>
    %cst_25 = arith.constant dense<0.000000e+00> : vector<2x32xf32>
    %33 = tpu.matmul %26, %4, %cst_25 {dimension_numbers = #tpu.dot_dimension_numbers<[1], [0], [0], [1], [0, 0, 1, 1], [], []>} : vector<2x32xf32>, vector<32x32xf32>, vector<2x32xf32> -> vector<2x32xf32>
    %34 = arith.addf %32, %33 : vector<2x32xf32>
    %35 = vector.broadcast %5 : vector<1x32xf32> to vector<2x32xf32>
    %36 = arith.addf %34, %35 : vector<2x32xf32>
    %cst_26 = arith.constant 0.000000e+00 : f32
    %37 = vector.broadcast %cst_26 : f32 to vector<2x32xf32>
    %38 = arith.maximumf %36, %37 : vector<2x32xf32>
    %c4 = arith.constant 4 : index
    %c0_27 = arith.constant 0 : index
    %39 = vector.load %arg3[%c4, %c0_27] : memref<16x32xf32, #tpu.memory_space<vmem>>, vector<2x32xf32>
    %cst_28 = arith.constant dense<0.000000e+00> : vector<2x32xf32>
    %40 = tpu.matmul %31, %2, %cst_28 {dimension_numbers = #tpu.dot_dimension_numbers<[1], [0], [0], [1], [0, 0, 1, 1], [], []>} : vector<2x32xf32>, vector<32x32xf32>, vector<2x32xf32> -> vector<2x32xf32>
    %41 = arith.addf %39, %40 : vector<2x32xf32>
    %cst_29 = arith.constant 0.000000e+00 : f32
    %42 = vector.broadcast %cst_29 : f32 to vector<2x32xf32>
    %43 = arith.maximumf %41, %42 : vector<2x32xf32>
    %cst_30 = arith.constant dense<0.000000e+00> : vector<2x32xf32>
    %44 = tpu.matmul %43, %3, %cst_30 {dimension_numbers = #tpu.dot_dimension_numbers<[1], [0], [0], [1], [0, 0, 1, 1], [], []>} : vector<2x32xf32>, vector<32x32xf32>, vector<2x32xf32> -> vector<2x32xf32>
    %cst_31 = arith.constant dense<0.000000e+00> : vector<2x32xf32>
    %45 = tpu.matmul %38, %4, %cst_31 {dimension_numbers = #tpu.dot_dimension_numbers<[1], [0], [0], [1], [0, 0, 1, 1], [], []>} : vector<2x32xf32>, vector<32x32xf32>, vector<2x32xf32> -> vector<2x32xf32>
    %46 = arith.addf %44, %45 : vector<2x32xf32>
    %47 = vector.broadcast %5 : vector<1x32xf32> to vector<2x32xf32>
    %48 = arith.addf %46, %47 : vector<2x32xf32>
    %cst_32 = arith.constant 0.000000e+00 : f32
    %49 = vector.broadcast %cst_32 : f32 to vector<2x32xf32>
    %50 = arith.maximumf %48, %49 : vector<2x32xf32>
    %c6 = arith.constant 6 : index
    %c0_33 = arith.constant 0 : index
    %51 = vector.load %arg3[%c6, %c0_33] : memref<16x32xf32, #tpu.memory_space<vmem>>, vector<2x32xf32>
    %cst_34 = arith.constant dense<0.000000e+00> : vector<2x32xf32>
    %52 = tpu.matmul %43, %2, %cst_34 {dimension_numbers = #tpu.dot_dimension_numbers<[1], [0], [0], [1], [0, 0, 1, 1], [], []>} : vector<2x32xf32>, vector<32x32xf32>, vector<2x32xf32> -> vector<2x32xf32>
    %53 = arith.addf %51, %52 : vector<2x32xf32>
    %cst_35 = arith.constant 0.000000e+00 : f32
    %54 = vector.broadcast %cst_35 : f32 to vector<2x32xf32>
    %55 = arith.maximumf %53, %54 : vector<2x32xf32>
    %cst_36 = arith.constant dense<0.000000e+00> : vector<2x32xf32>
    %56 = tpu.matmul %55, %3, %cst_36 {dimension_numbers = #tpu.dot_dimension_numbers<[1], [0], [0], [1], [0, 0, 1, 1], [], []>} : vector<2x32xf32>, vector<32x32xf32>, vector<2x32xf32> -> vector<2x32xf32>
    %cst_37 = arith.constant dense<0.000000e+00> : vector<2x32xf32>
    %57 = tpu.matmul %50, %4, %cst_37 {dimension_numbers = #tpu.dot_dimension_numbers<[1], [0], [0], [1], [0, 0, 1, 1], [], []>} : vector<2x32xf32>, vector<32x32xf32>, vector<2x32xf32> -> vector<2x32xf32>
    %58 = arith.addf %56, %57 : vector<2x32xf32>
    %59 = vector.broadcast %5 : vector<1x32xf32> to vector<2x32xf32>
    %60 = arith.addf %58, %59 : vector<2x32xf32>
    %cst_38 = arith.constant 0.000000e+00 : f32
    %61 = vector.broadcast %cst_38 : f32 to vector<2x32xf32>
    %62 = arith.maximumf %60, %61 : vector<2x32xf32>
    %c8 = arith.constant 8 : index
    %c0_39 = arith.constant 0 : index
    %63 = vector.load %arg3[%c8, %c0_39] : memref<16x32xf32, #tpu.memory_space<vmem>>, vector<2x32xf32>
    %cst_40 = arith.constant dense<0.000000e+00> : vector<2x32xf32>
    %64 = tpu.matmul %55, %2, %cst_40 {dimension_numbers = #tpu.dot_dimension_numbers<[1], [0], [0], [1], [0, 0, 1, 1], [], []>} : vector<2x32xf32>, vector<32x32xf32>, vector<2x32xf32> -> vector<2x32xf32>
    %65 = arith.addf %63, %64 : vector<2x32xf32>
    %cst_41 = arith.constant 0.000000e+00 : f32
    %66 = vector.broadcast %cst_41 : f32 to vector<2x32xf32>
    %67 = arith.maximumf %65, %66 : vector<2x32xf32>
    %cst_42 = arith.constant dense<0.000000e+00> : vector<2x32xf32>
    %68 = tpu.matmul %67, %3, %cst_42 {dimension_numbers = #tpu.dot_dimension_numbers<[1], [0], [0], [1], [0, 0, 1, 1], [], []>} : vector<2x32xf32>, vector<32x32xf32>, vector<2x32xf32> -> vector<2x32xf32>
    %cst_43 = arith.constant dense<0.000000e+00> : vector<2x32xf32>
    %69 = tpu.matmul %62, %4, %cst_43 {dimension_numbers = #tpu.dot_dimension_numbers<[1], [0], [0], [1], [0, 0, 1, 1], [], []>} : vector<2x32xf32>, vector<32x32xf32>, vector<2x32xf32> -> vector<2x32xf32>
    %70 = arith.addf %68, %69 : vector<2x32xf32>
    %71 = vector.broadcast %5 : vector<1x32xf32> to vector<2x32xf32>
    %72 = arith.addf %70, %71 : vector<2x32xf32>
    %cst_44 = arith.constant 0.000000e+00 : f32
    %73 = vector.broadcast %cst_44 : f32 to vector<2x32xf32>
    %74 = arith.maximumf %72, %73 : vector<2x32xf32>
    %c10 = arith.constant 10 : index
    %c0_45 = arith.constant 0 : index
    %75 = vector.load %arg3[%c10, %c0_45] : memref<16x32xf32, #tpu.memory_space<vmem>>, vector<2x32xf32>
    %cst_46 = arith.constant dense<0.000000e+00> : vector<2x32xf32>
    %76 = tpu.matmul %67, %2, %cst_46 {dimension_numbers = #tpu.dot_dimension_numbers<[1], [0], [0], [1], [0, 0, 1, 1], [], []>} : vector<2x32xf32>, vector<32x32xf32>, vector<2x32xf32> -> vector<2x32xf32>
    %77 = arith.addf %75, %76 : vector<2x32xf32>
    %cst_47 = arith.constant 0.000000e+00 : f32
    %78 = vector.broadcast %cst_47 : f32 to vector<2x32xf32>
    %79 = arith.maximumf %77, %78 : vector<2x32xf32>
    %cst_48 = arith.constant dense<0.000000e+00> : vector<2x32xf32>
    %80 = tpu.matmul %79, %3, %cst_48 {dimension_numbers = #tpu.dot_dimension_numbers<[1], [0], [0], [1], [0, 0, 1, 1], [], []>} : vector<2x32xf32>, vector<32x32xf32>, vector<2x32xf32> -> vector<2x32xf32>
    %cst_49 = arith.constant dense<0.000000e+00> : vector<2x32xf32>
    %81 = tpu.matmul %74, %4, %cst_49 {dimension_numbers = #tpu.dot_dimension_numbers<[1], [0], [0], [1], [0, 0, 1, 1], [], []>} : vector<2x32xf32>, vector<32x32xf32>, vector<2x32xf32> -> vector<2x32xf32>
    %82 = arith.addf %80, %81 : vector<2x32xf32>
    %83 = vector.broadcast %5 : vector<1x32xf32> to vector<2x32xf32>
    %84 = arith.addf %82, %83 : vector<2x32xf32>
    %cst_50 = arith.constant 0.000000e+00 : f32
    %85 = vector.broadcast %cst_50 : f32 to vector<2x32xf32>
    %86 = arith.maximumf %84, %85 : vector<2x32xf32>
    %c12 = arith.constant 12 : index
    %c0_51 = arith.constant 0 : index
    %87 = vector.load %arg3[%c12, %c0_51] : memref<16x32xf32, #tpu.memory_space<vmem>>, vector<2x32xf32>
    %cst_52 = arith.constant dense<0.000000e+00> : vector<2x32xf32>
    %88 = tpu.matmul %79, %2, %cst_52 {dimension_numbers = #tpu.dot_dimension_numbers<[1], [0], [0], [1], [0, 0, 1, 1], [], []>} : vector<2x32xf32>, vector<32x32xf32>, vector<2x32xf32> -> vector<2x32xf32>
    %89 = arith.addf %87, %88 : vector<2x32xf32>
    %cst_53 = arith.constant 0.000000e+00 : f32
    %90 = vector.broadcast %cst_53 : f32 to vector<2x32xf32>
    %91 = arith.maximumf %89, %90 : vector<2x32xf32>
    %cst_54 = arith.constant dense<0.000000e+00> : vector<2x32xf32>
    %92 = tpu.matmul %91, %3, %cst_54 {dimension_numbers = #tpu.dot_dimension_numbers<[1], [0], [0], [1], [0, 0, 1, 1], [], []>} : vector<2x32xf32>, vector<32x32xf32>, vector<2x32xf32> -> vector<2x32xf32>
    %cst_55 = arith.constant dense<0.000000e+00> : vector<2x32xf32>
    %93 = tpu.matmul %86, %4, %cst_55 {dimension_numbers = #tpu.dot_dimension_numbers<[1], [0], [0], [1], [0, 0, 1, 1], [], []>} : vector<2x32xf32>, vector<32x32xf32>, vector<2x32xf32> -> vector<2x32xf32>
    %94 = arith.addf %92, %93 : vector<2x32xf32>
    %95 = vector.broadcast %5 : vector<1x32xf32> to vector<2x32xf32>
    %96 = arith.addf %94, %95 : vector<2x32xf32>
    %cst_56 = arith.constant 0.000000e+00 : f32
    %97 = vector.broadcast %cst_56 : f32 to vector<2x32xf32>
    %98 = arith.maximumf %96, %97 : vector<2x32xf32>
    %c14 = arith.constant 14 : index
    %c0_57 = arith.constant 0 : index
    %99 = vector.load %arg3[%c14, %c0_57] : memref<16x32xf32, #tpu.memory_space<vmem>>, vector<2x32xf32>
    %cst_58 = arith.constant dense<0.000000e+00> : vector<2x32xf32>
    %100 = tpu.matmul %91, %2, %cst_58 {dimension_numbers = #tpu.dot_dimension_numbers<[1], [0], [0], [1], [0, 0, 1, 1], [], []>} : vector<2x32xf32>, vector<32x32xf32>, vector<2x32xf32> -> vector<2x32xf32>
    %101 = arith.addf %99, %100 : vector<2x32xf32>
    %cst_59 = arith.constant 0.000000e+00 : f32
    %102 = vector.broadcast %cst_59 : f32 to vector<2x32xf32>
    %103 = arith.maximumf %101, %102 : vector<2x32xf32>
    %cst_60 = arith.constant dense<0.000000e+00> : vector<2x32xf32>
    %104 = tpu.matmul %103, %3, %cst_60 {dimension_numbers = #tpu.dot_dimension_numbers<[1], [0], [0], [1], [0, 0, 1, 1], [], []>} : vector<2x32xf32>, vector<32x32xf32>, vector<2x32xf32> -> vector<2x32xf32>
    %cst_61 = arith.constant dense<0.000000e+00> : vector<2x32xf32>
    %105 = tpu.matmul %98, %4, %cst_61 {dimension_numbers = #tpu.dot_dimension_numbers<[1], [0], [0], [1], [0, 0, 1, 1], [], []>} : vector<2x32xf32>, vector<32x32xf32>, vector<2x32xf32> -> vector<2x32xf32>
    %106 = arith.addf %104, %105 : vector<2x32xf32>
    %107 = vector.broadcast %5 : vector<1x32xf32> to vector<2x32xf32>
    %108 = arith.addf %106, %107 : vector<2x32xf32>
    %cst_62 = arith.constant 0.000000e+00 : f32
    %109 = vector.broadcast %cst_62 : f32 to vector<2x32xf32>
    %110 = arith.maximumf %108, %109 : vector<2x32xf32>
    %111 = tpu.concatenate %26, %38, %50, %62, %74, %86, %98, %110 in 0 : vector<2x32xf32>, vector<2x32xf32>, vector<2x32xf32>, vector<2x32xf32>, vector<2x32xf32>, vector<2x32xf32>, vector<2x32xf32>, vector<2x32xf32> -> vector<16x32xf32>
    %cst_63 = arith.constant dense<0.000000e+00> : vector<16x16xf32>
    %112 = tpu.matmul %111, %6, %cst_63 {dimension_numbers = #tpu.dot_dimension_numbers<[1], [0], [0], [1], [0, 0, 1, 1], [], []>} : vector<16x32xf32>, vector<32x16xf32>, vector<16x16xf32> -> vector<16x16xf32>
    %113 = vector.broadcast %7 : vector<1x16xf32> to vector<16x16xf32>
    %114 = arith.addf %112, %113 : vector<16x16xf32>
    %c0_64 = arith.constant 0 : index
    %c0_65 = arith.constant 0 : index
    %115 = vector.load %arg2[%c0_64, %c0_65] : memref<16x16xf32, #tpu.memory_space<vmem>>, vector<16x16xf32>
    tpu.vector_store %arg2[%c0_64, %c0_65], %114 {strides = array<i32>} : memref<16x16xf32, #tpu.memory_space<vmem>>, vector<16x16xf32>,
    return
  }
}

</mosaic_0001>

<llo_original>
// kernel: tpu_custom_call.1
$region0: #{tpu_custom_call.1}
  #allocation0 [shape = 'u32[]', space=smem, size = 0x4, offset = 0x4, fixed_abs, tag = 'smem constant byte address 0x4 - core index']
  #allocation1 [shape = 'u32[144,128]{1,0:T(1,128)}', space=vmem, size = 0x12000, scoped, tag = 'internal scratch']
  #allocation2 [shape = 'f32[16,32]{1,0:T(8,128)}', space=vmem, size = 0x2000, scoped, tag = 'scratch operand']
  %s0 = inlined_call_operand.hbm [shape: f32[16,16], index: 0, kind: input, shape index: {}]
  %s1 = inlined_call_operand.hbm [shape: f32[168,128], index: 1, kind: input, shape index: {}]
  %s2 = inlined_call_operand.hbm [shape: f32[16,16], index: 2, kind: output, shape index: {}]
  %s3 = sld [smem:[#allocation0]]
  $region26: #{tpu_custom_call.1} parent=0
    _
  %s5 = ssub.s32 1, %s3
  %s6 = scalar_select 0, %s5, %s3
  $region1: #{tpu_custom_call.1} parent=0
    #allocation3 [shape = 'u8[8192]{0}', space=vmem, size = 0x2000, scoped, tag = 'input window, operand 0, single buffered']
    #allocation4 [shape = 's32[1]{0}', space=sflag, size = 0x4, scoped, tag = 'scoped memory for tpu_custom_call.1']
    #allocation5 [shape = 's32[1]{0}', space=sflag, size = 0x4, scoped, tag = 'scoped memory for tpu_custom_call.1']
    #allocation6 [shape = 'u8[86016]{0}', space=vmem, size = 0x15000, scoped, tag = 'input window, operand 1, single buffered']
    #allocation7 [shape = 's32[1]{0}', space=sflag, size = 0x4, scoped, tag = 'scoped memory for tpu_custom_call.1']
    #allocation8 [shape = 'u8[8192]{0}', space=vmem, size = 0x2000, scoped, tag = 'output window, operand 0, single buffered']
    %7 = vsyncpa [#allocation4], 0
    %8 = vsyncpa [#allocation7], 0
    %9 = vsyncpa [#allocation5], 0
    // Predicated region
    $region2: #{tpu_custom_call.1} parent=1 // pred_check
      _
    $region3: #{tpu_custom_call.1} parent=1 // pred_check_branch
      %11 = sbr.rel (0) target = $region5
    $region4: #{tpu_custom_call.1} parent=1 // pred_region
      %s13 = ssub.s32 256, 256
      %14 = vsyncadd [#allocation4], %s13
      %s15 = sshll.u32 [#allocation3], 4
      %s16 = int_to_ptr.vmem [resolvable:$true] %s15
      %21 = dma.hbm_to_vmem [thread:$0]  %s0, 256, %s16, [#allocation4], 128, 128, 8
    $region5: #{tpu_custom_call.1} parent=1 // pred_fallthru
      _
    // Predicated region
    $region6: #{tpu_custom_call.1} parent=1 // pred_check
      _
    $region7: #{tpu_custom_call.1} parent=1 // pred_check_branch
      %23 = sbr.rel (0) target = $region9
    $region8: #{tpu_custom_call.1} parent=1 // pred_region
      %s25 = ssub.s32 2688, 2688
      %26 = vsyncadd [#allocation7], %s25
      %s27 = sshll.u32 [#allocation6], 4
      %s28 = int_to_ptr.vmem [resolvable:$true] %s27
      %33 = dma.hbm_to_vmem [thread:$0]  %s1, 2688, %s28, [#allocation7], 128, 128, 8
    $region9: #{tpu_custom_call.1} parent=1 // pred_fallthru
      _
    // Predicated region
    $region10: #{tpu_custom_call.1} parent=1 // pred_check
      _
    $region11: #{tpu_custom_call.1} parent=1 // pred_check_branch
      %35 = sbr.rel (0) target = $region13
    $region12: #{tpu_custom_call.1} parent=1 // pred_region
      %36 = dma.done [#allocation4], 256
    $region13: #{tpu_custom_call.1} parent=1 // pred_fallthru
      _
    // Predicated region
    $region14: #{tpu_custom_call.1} parent=1 // pred_check
      _
    $region15: #{tpu_custom_call.1} parent=1 // pred_check_branch
      %38 = sbr.rel (0) target = $region17
    $region16: #{tpu_custom_call.1} parent=1 // pred_region
      %39 = dma.done [#allocation7], 2688
    $region17: #{tpu_custom_call.1} parent=1 // pred_fallthru
      _
    %v40 = vld [vmem:[#allocation6] sm:$0xff]
    %v41 = vld [vmem:[#allocation6 + $0x8] sm:$0xff]
    %v42 = vld [vmem:[#allocation6 + $0x10] sm:$0x1]
    %v43 = vld [vmem:[#allocation6 + $0x18] sm:$0xff]
    %v44 = vld [vmem:[#allocation6 + $0x20] sm:$0xff]
    %v45 = vld [vmem:[#allocation6 + $0x28] sm:$0xff]
    %v46 = vld [vmem:[#allocation6 + $0x30] sm:$0xff]
    %v47 = vld [vmem:[#allocation6 + $0x38] sm:$0xff]
    %v48 = vld [vmem:[#allocation6 + $0x40] sm:$0xff]
    %v49 = vld [vmem:[#allocation6 + $0x48] sm:$0xff]
    %v50 = vld [vmem:[#allocation6 + $0x50] sm:$0xff]
    %v51 = vld [vmem:[#allocation6 + $0x58] sm:$0xff]
    %v52 = vld [vmem:[#allocation6 + $0x60] sm:$0xff]
    %v53 = vld [vmem:[#allocation6 + $0x68] sm:$0xff]
    %v54 = vld [vmem:[#allocation6 + $0x70] sm:$0xff]
    %v55 = vld [vmem:[#allocation6 + $0x78] sm:$0x1]
    %v56 = vld [vmem:[#allocation6 + $0x80] sm:$0xff]
    %v57 = vld [vmem:[#allocation6 + $0x88] sm:$0xff]
    %v58 = vld [vmem:[#allocation6 + $0x90] sm:$0xff]
    %v59 = vld [vmem:[#allocation6 + $0x98] sm:$0xff]
    %v60 = vld [vmem:[#allocation6 + $0xa0] sm:$0x1]
    %v61 = vld [vmem:[#allocation3] sm:$0xff]
    %v62 = vld [vmem:[#allocation3 + $0x8] sm:$0xff]
    %v63 = vlaneseq
    %v64 = vshrl.u32 %v63, 7
    %v65 = vsub.s32 0, %v64
    %v66 = vrot.slane %v42, %v65
    %vm67 = vcmask 130048
    %v69 = vsel %vm67, %v61, 0
    %v72 = vsel %vm67, %v62, 0
    %74 = vmatprep.subr.mxu0 0.0
    %75 = vmatpush1.msra.mxu0 %v40
    %76 = vmatprep.subr.mxu0 0.0
    %77 = vmatpush1.msra.mxu0 %v41
    %78 = vmatprep.subr.mxu0 0.0
    %79 = vmatpush1.msra.mxu0 0.0
    %80 = vmatprep.subr.mxu0 0.0
    %81 = vmatpush1.msra.mxu0 0.0
    %82 = vmatprep.subr.mxu0 0.0
    %83 = vmatpush1.msra.mxu0 0.0
    %84 = vmatprep.subr.mxu0 0.0
    %85 = vmatpush1.msra.mxu0 0.0
    %86 = vmatprep.subr.mxu0 0.0
    %87 = vmatpush1.msra.mxu0 0.0
    %88 = vmatprep.subr.mxu0 0.0
    %89 = vmatpush1.msra.mxu0 0.0
    %90 = vmatprep.subr.mxu0 0.0
    %91 = vmatpush1.msra.mxu0 0.0
    %92 = vmatprep.subr.mxu0 0.0
    %93 = vmatpush1.msra.mxu0 0.0
    %94 = vmatprep.subr.mxu0 0.0
    %95 = vmatpush1.msra.mxu0 0.0
    %96 = vmatprep.subr.mxu0 0.0
    %97 = vmatpush1.msra.mxu0 0.0
    %98 = vmatprep.subr.mxu0 0.0
    %99 = vmatpush1.msra.mxu0 0.0
    %100 = vmatprep.subr.mxu0 0.0
    %101 = vmatpush1.msra.mxu0 0.0
    %102 = vmatprep.subr.mxu0 0.0
    %103 = vmatpush1.msra.mxu0 0.0
    %104 = vmatprep.subr.mxu0 0.0
    %105 = vmatpush1.msra.mxu0 0.0
    %106 = vmatprep.subr.mxu0 0.0
    %107 = vmatpush1.msra.mxu0 0.0
    %108 = vmatprep.subr.mxu0 0.0
    %109 = vmatpush1.msra.mxu0 0.0
    %110 = vmatprep.subr.mxu0 0.0
    %111 = vmatpush1.msra.mxu0 0.0
    %112 = vmatprep.subr.mxu0 0.0
    %113 = vmatpush1.msra.mxu0 0.0
    %114 = vmatprep.subr.mxu0 0.0
    %115 = vmatpush1.msra.mxu0 0.0
    %116 = vmatprep.subr.mxu0 0.0
    %117 = vmatpush1.msra.mxu0 0.0
    %118 = vmatprep.subr.mxu0 0.0
    %119 = vmatpush1.msra.mxu0 0.0
    %120 = vmatprep.subr.mxu0 0.0
    %121 = vmatpush1.msra.mxu0 0.0
    %122 = vmatprep.subr.mxu0 0.0
    %123 = vmatpush1.msra.mxu0 0.0
    %124 = vmatprep.subr.mxu0 0.0
    %125 = vmatpush1.msra.mxu0 0.0
    %126 = vmatprep.subr.mxu0 0.0
    %127 = vmatpush1.msra.mxu0 0.0
    %128 = vmatprep.subr.mxu0 0.0
    %129 = vmatpush1.msra.mxu0 0.0
    %130 = vmatprep.subr.mxu0 0.0
    %131 = vmatpush1.msra.mxu0 0.0
    %132 = vmatprep.subr.mxu0 0.0
    %133 = vmatpush1.msra.mxu0 0.0
    %134 = vmatprep.subr.mxu0 0.0
    %135 = vmatpush1.msra.mxu0 0.0
    %136 = vmatprep.subr.mxu0 0.0
    %137 = vmatpush1.msra.mxu0 0.0
    %138 = vmatprep.mubr.f32.mxu0 0.0
    %139 = vmatmul.mubr.f32.gmra.mrb[0].mxu0 %v69
    %v140 = vpop.f32.mrb[0].mxu0
    %v141 = vadd.f32 %v66, %v140
    %v142 = vpop.f32.mrb[0].mxu0
    %143 = vmatprep.mubr.f32.mxu0 0.0
    %144 = vmatmul.mubr.f32.gmra.mrb[0].mxu0 %v72
    %v145 = vpop.f32.mrb[0].mxu0
    %v146 = vadd.f32 %v66, %v145
    %v147 = vpop.f32.mrb[0].mxu0
    %148 = vdwg.mxu0
    %vm149 = vcmask 261120
    %150 = vst.msk [vmem:[#allocation2] sm:$0xff] %vm149, %v141
    %151 = vst.msk [vmem:[#allocation2 + $0x8] sm:$0xff] %vm149, %v146
    %v152 = vld [vmem:[#allocation2] sm:$0x3]
    %v154 = vsel %vm149, 0.0, 0
    %156 = vmatprep.subr.mxu0 0.0
    %157 = vmatpush1.msra.mxu0 %v43
    %158 = vmatprep.subr.mxu0 0.0
    %159 = vmatpush1.msra.mxu0 %v44
    %160 = vmatprep.subr.mxu0 0.0
    %161 = vmatpush1.msra.mxu0 %v45
    %162 = vmatprep.subr.mxu0 0.0
    %163 = vmatpush1.msra.mxu0 %v46
    %164 = vmatprep.subr.mxu0 0.0
    %165 = vmatpush1.msra.mxu0 0.0
    %166 = vmatprep.subr.mxu0 0.0
    %167 = vmatpush1.msra.mxu0 0.0
    %168 = vmatprep.subr.mxu0 0.0
    %169 = vmatpush1.msra.mxu0 0.0
    %170 = vmatprep.subr.mxu0 0.0
    %171 = vmatpush1.msra.mxu0 0.0
    %172 = vmatprep.subr.mxu0 0.0
    %173 = vmatpush1.msra.mxu0 0.0
    %174 = vmatprep.subr.mxu0 0.0
    %175 = vmatpush1.msra.mxu0 0.0
    %176 = vmatprep.subr.mxu0 0.0
    %177 = vmatpush1.msra.mxu0 0.0
    %178 = vmatprep.subr.mxu0 0.0
    %179 = vmatpush1.msra.mxu0 0.0
    %180 = vmatprep.subr.mxu0 0.0
    %181 = vmatpush1.msra.mxu0 0.0
    %182 = vmatprep.subr.mxu0 0.0
    %183 = vmatpush1.msra.mxu0 0.0
    %184 = vmatprep.subr.mxu0 0.0
    %185 = vmatpush1.msra.mxu0 0.0
    %186 = vmatprep.subr.mxu0 0.0
    %187 = vmatpush1.msra.mxu0 0.0
    %188 = vmatprep.subr.mxu0 0.0
    %189 = vmatpush1.msra.mxu0 0.0
    %190 = vmatprep.subr.mxu0 0.0
    %191 = vmatpush1.msra.mxu0 0.0
    %192 = vmatprep.subr.mxu0 0.0
    %193 = vmatpush1.msra.mxu0 0.0
    %194 = vmatprep.subr.mxu0 0.0
    %195 = vmatpush1.msra.mxu0 0.0
    %196 = vmatprep.subr.mxu0 0.0
    %197 = vmatpush1.msra.mxu0 0.0
    %198 = vmatprep.subr.mxu0 0.0
    %199 = vmatpush1.msra.mxu0 0.0
    %200 = vmatprep.subr.mxu0 0.0
    %201 = vmatpush1.msra.mxu0 0.0
    %202 = vmatprep.subr.mxu0 0.0
    %203 = vmatpush1.msra.mxu0 0.0
    %204 = vmatprep.subr.mxu0 0.0
    %205 = vmatpush1.msra.mxu0 0.0
    %206 = vmatprep.subr.mxu0 0.0
    %207 = vmatpush1.msra.mxu0 0.0
    %208 = vmatprep.subr.mxu0 0.0
    %209 = vmatpush1.msra.mxu0 0.0
    %210 = vmatprep.subr.mxu0 0.0
    %211 = vmatpush1.msra.mxu0 0.0
    %212 = vmatprep.subr.mxu0 0.0
    %213 = vmatpush1.msra.mxu0 0.0
    %214 = vmatprep.subr.mxu0 0.0
    %215 = vmatpush1.msra.mxu0 0.0
    %216 = vmatprep.subr.mxu0 0.0
    %217 = vmatpush1.msra.mxu0 0.0
    %218 = vmatprep.subr.mxu0 0.0
    %219 = vmatpush1.msra.mxu0 0.0
    %220 = vmatprep.mubr.f32.mxu0 0.0
    %221 = vmatmul.mubr.f32.gmra.mrb[0].mxu0 %v154
    %v222 = vpop.f32.mrb[0].mxu0
    %v223 = vadd.f32 0.0, %v222
    %v224 = vpop.f32.mrb[0].mxu0
    %225 = vdwg.mxu0
    %v226 = vadd.f32 %v152, %v223
    %v227 = vmax.f32 %v226, 0.0
    %228 = vmatprep.subr.mxu0 0.0
    %229 = vmatpush1.msra.mxu0 %v51
    %230 = vmatprep.subr.mxu0 0.0
    %231 = vmatpush1.msra.mxu0 %v52
    %232 = vmatprep.subr.mxu0 0.0
    %233 = vmatpush1.msra.mxu0 %v53
    %234 = vmatprep.subr.mxu0 0.0
    %235 = vmatpush1.msra.mxu0 %v54
    %236 = vmatprep.subr.mxu0 0.0
    %237 = vmatpush1.msra.mxu0 0.0
    %238 = vmatprep.subr.mxu0 0.0
    %239 = vmatpush1.msra.mxu0 0.0
    %240 = vmatprep.subr.mxu0 0.0
    %241 = vmatpush1.msra.mxu0 0.0
    %242 = vmatprep.subr.mxu0 0.0
    %243 = vmatpush1.msra.mxu0 0.0
    %244 = vmatprep.subr.mxu0 0.0
    %245 = vmatpush1.msra.mxu0 0.0
    %246 = vmatprep.subr.mxu0 0.0
    %247 = vmatpush1.msra.mxu0 0.0
    %248 = vmatprep.subr.mxu0 0.0
    %249 = vmatpush1.msra.mxu0 0.0
    %250 = vmatprep.subr.mxu0 0.0
    %251 = vmatpush1.msra.mxu0 0.0
    %252 = vmatprep.subr.mxu0 0.0
    %253 = vmatpush1.msra.mxu0 0.0
    %254 = vmatprep.subr.mxu0 0.0
    %255 = vmatpush1.msra.mxu0 0.0
    %256 = vmatprep.subr.mxu0 0.0
    %257 = vmatpush1.msra.mxu0 0.0
    %258 = vmatprep.subr.mxu0 0.0
    %259 = vmatpush1.msra.mxu0 0.0
    %260 = vmatprep.subr.mxu0 0.0
    %261 = vmatpush1.msra.mxu0 0.0
    %262 = vmatprep.subr.mxu0 0.0
    %263 = vmatpush1.msra.mxu0 0.0
    %264 = vmatprep.subr.mxu0 0.0
    %265 = vmatpush1.msra.mxu0 0.0
    %266 = vmatprep.subr.mxu0 0.0
    %267 = vmatpush1.msra.mxu0 0.0
    %268 = vmatprep.subr.mxu0 0.0
    %269 = vmatpush1.msra.mxu0 0.0
    %270 = vmatprep.subr.mxu0 0.0
    %271 = vmatpush1.msra.mxu0 0.0
    %272 = vmatprep.subr.mxu0 0.0
    %273 = vmatpush1.msra.mxu0 0.0
    %274 = vmatprep.subr.mxu0 0.0
    %275 = vmatpush1.msra.mxu0 0.0
    %276 = vmatprep.subr.mxu0 0.0
    %277 = vmatpush1.msra.mxu0 0.0
    %278 = vmatprep.subr.mxu0 0.0
    %279 = vmatpush1.msra.mxu0 0.0
    %280 = vmatprep.subr.mxu0 0.0
    %281 = vmatpush1.msra.mxu0 0.0
    %282 = vmatprep.subr.mxu0 0.0
    %283 = vmatpush1.msra.mxu0 0.0
    %284 = vmatprep.subr.mxu0 0.0
    %285 = vmatpush1.msra.mxu0 0.0
    %286 = vmatprep.subr.mxu0 0.0
    %287 = vmatpush1.msra.mxu0 0.0
    %288 = vmatprep.subr.mxu0 0.0
    %289 = vmatpush1.msra.mxu0 0.0
    %290 = vmatprep.subr.mxu0 0.0
    %291 = vmatpush1.msra.mxu0 0.0
    %292 = vmatprep.mubr.f32.mxu0 0.0
    %293 = vmatmul.mubr.f32.gmra.mrb[0].mxu0 %v154
    %v294 = vpop.f32.mrb[0].mxu0
    %v295 = vadd.f32 0.0, %v294
    %v296 = vpop.f32.mrb[0].mxu0
    %297 = vdwg.mxu0
    %v299 = vsel %vm149, %v227, 0
    %301 = vmatprep.subr.mxu0 0.0
    %302 = vmatpush1.msra.mxu0 %v47
    %303 = vmatprep.subr.mxu0 0.0
    %304 = vmatpush1.msra.mxu0 %v48
    %305 = vmatprep.subr.mxu0 0.0
    %306 = vmatpush1.msra.mxu0 %v49
    %307 = vmatprep.subr.mxu0 0.0
    %308 = vmatpush1.msra.mxu0 %v50
    %309 = vmatprep.subr.mxu0 0.0
    %310 = vmatpush1.msra.mxu0 0.0
    %311 = vmatprep.subr.mxu0 0.0
    %312 = vmatpush1.msra.mxu0 0.0
    %313 = vmatprep.subr.mxu0 0.0
    %314 = vmatpush1.msra.mxu0 0.0
    %315 = vmatprep.subr.mxu0 0.0
    %316 = vmatpush1.msra.mxu0 0.0
    %317 = vmatprep.subr.mxu0 0.0
    %318 = vmatpush1.msra.mxu0 0.0
    %319 = vmatprep.subr.mxu0 0.0
    %320 = vmatpush1.msra.mxu0 0.0
    %321 = vmatprep.subr.mxu0 0.0
    %322 = vmatpush1.msra.mxu0 0.0
    %323 = vmatprep.subr.mxu0 0.0
    %324 = vmatpush1.msra.mxu0 0.0
    %325 = vmatprep.subr.mxu0 0.0
    %326 = vmatpush1.msra.mxu0 0.0
    %327 = vmatprep.subr.mxu0 0.0
    %328 = vmatpush1.msra.mxu0 0.0
    %329 = vmatprep.subr.mxu0 0.0
    %330 = vmatpush1.msra.mxu0 0.0
    %331 = vmatprep.subr.mxu0 0.0
    %332 = vmatpush1.msra.mxu0 0.0
    %333 = vmatprep.subr.mxu0 0.0
    %334 = vmatpush1.msra.mxu0 0.0
    %335 = vmatprep.subr.mxu0 0.0
    %336 = vmatpush1.msra.mxu0 0.0
    %337 = vmatprep.subr.mxu0 0.0
    %338 = vmatpush1.msra.mxu0 0.0
    %339 = vmatprep.subr.mxu0 0.0
    %340 = vmatpush1.msra.mxu0 0.0
    %341 = vmatprep.subr.mxu0 0.0
    %342 = vmatpush1.msra.mxu0 0.0
    %343 = vmatprep.subr.mxu0 0.0
    %344 = vmatpush1.msra.mxu0 0.0
    %345 = vmatprep.subr.mxu0 0.0
    %346 = vmatpush1.msra.mxu0 0.0
    %347 = vmatprep.subr.mxu0 0.0
    %348 = vmatpush1.msra.mxu0 0.0
    %349 = vmatprep.subr.mxu0 0.0
    %350 = vmatpush1.msra.mxu0 0.0
    %351 = vmatprep.subr.mxu0 0.0
    %352 = vmatpush1.msra.mxu0 0.0
    %353 = vmatprep.subr.mxu0 0.0
    %354 = vmatpush1.msra.mxu0 0.0
    %355 = vmatprep.subr.mxu0 0.0
    %356 = vmatpush1.msra.mxu0 0.0
    %357 = vmatprep.subr.mxu0 0.0
    %358 = vmatpush1.msra.mxu0 0.0
    %359 = vmatprep.subr.mxu0 0.0
    %360 = vmatpush1.msra.mxu0 0.0
    %361 = vmatprep.subr.mxu0 0.0
    %362 = vmatpush1.msra.mxu0 0.0
    %363 = vmatprep.subr.mxu0 0.0
    %364 = vmatpush1.msra.mxu0 0.0
    %365 = vmatprep.mubr.f32.mxu0 0.0
    %366 = vmatmul.mubr.f32.gmra.mrb[0].mxu0 %v299
    %v367 = vpop.f32.mrb[0].mxu0
    %v368 = vadd.f32 %v295, %v367
    %v369 = vpop.f32.mrb[0].mxu0
    %370 = vdwg.mxu0
    %v371 = vlaneseq
    %v372 = vshrl.u32 %v371, 7
    %v373 = vsub.s32 0, %v372
    %v374 = vrot.slane %v55, %v373
    %v375 = vadd.f32 %v368, %v374
    %v376 = vmax.f32 %v375, 0.0
    %v377 = vld [vmem:[#allocation2 + $0x2] sm:$0x3]
    %378 = vmatprep.subr.mxu0 0.0
    %379 = vmatpush1.msra.mxu0 %v43
    %380 = vmatprep.subr.mxu0 0.0
    %381 = vmatpush1.msra.mxu0 %v44
    %382 = vmatprep.subr.mxu0 0.0
    %383 = vmatpush1.msra.mxu0 %v45
    %384 = vmatprep.subr.mxu0 0.0
    %385 = vmatpush1.msra.mxu0 %v46
    %386 = vmatprep.subr.mxu0 0.0
    %387 = vmatpush1.msra.mxu0 0.0
    %388 = vmatprep.subr.mxu0 0.0
    %389 = vmatpush1.msra.mxu0 0.0
    %390 = vmatprep.subr.mxu0 0.0
    %391 = vmatpush1.msra.mxu0 0.0
    %392 = vmatprep.subr.mxu0 0.0
    %393 = vmatpush1.msra.mxu0 0.0
    %394 = vmatprep.subr.mxu0 0.0
    %395 = vmatpush1.msra.mxu0 0.0
    %396 = vmatprep.subr.mxu0 0.0
    %397 = vmatpush1.msra.mxu0 0.0
    %398 = vmatprep.subr.mxu0 0.0
    %399 = vmatpush1.msra.mxu0 0.0
    %400 = vmatprep.subr.mxu0 0.0
    %401 = vmatpush1.msra.mxu0 0.0
    %402 = vmatprep.subr.mxu0 0.0
    %403 = vmatpush1.msra.mxu0 0.0
    %404 = vmatprep.subr.mxu0 0.0
    %405 = vmatpush1.msra.mxu0 0.0
    %406 = vmatprep.subr.mxu0 0.0
    %407 = vmatpush1.msra.mxu0 0.0
    %408 = vmatprep.subr.mxu0 0.0
    %409 = vmatpush1.msra.mxu0 0.0
    %410 = vmatprep.subr.mxu0 0.0
    %411 = vmatpush1.msra.mxu0 0.0
    %412 = vmatprep.subr.mxu0 0.0
    %413 = vmatpush1.msra.mxu0 0.0
    %414 = vmatprep.subr.mxu0 0.0
    %415 = vmatpush1.msra.mxu0 0.0
    %416 = vmatprep.subr.mxu0 0.0
    %417 = vmatpush1.msra.mxu0 0.0
    %418 = vmatprep.subr.mxu0 0.0
    %419 = vmatpush1.msra.mxu0 0.0
    %420 = vmatprep.subr.mxu0 0.0
    %421 = vmatpush1.msra.mxu0 0.0
    %422 = vmatprep.subr.mxu0 0.0
    %423 = vmatpush1.msra.mxu0 0.0
    %424 = vmatprep.subr.mxu0 0.0
    %425 = vmatpush1.msra.mxu0 0.0
    %426 = vmatprep.subr.mxu0 0.0
    %427 = vmatpush1.msra.mxu0 0.0
    %428 = vmatprep.subr.mxu0 0.0
    %429 = vmatpush1.msra.mxu0 0.0
    %430 = vmatprep.subr.mxu0 0.0
    %431 = vmatpush1.msra.mxu0 0.0
    %432 = vmatprep.subr.mxu0 0.0
    %433 = vmatpush1.msra.mxu0 0.0
    %434 = vmatprep.subr.mxu0 0.0
    %435 = vmatpush1.msra.mxu0 0.0
    %436 = vmatprep.subr.mxu0 0.0
    %437 = vmatpush1.msra.mxu0 0.0
    %438 = vmatprep.subr.mxu0 0.0
    %439 = vmatpush1.msra.mxu0 0.0
    %440 = vmatprep.subr.mxu0 0.0
    %441 = vmatpush1.msra.mxu0 0.0
    %442 = vmatprep.mubr.f32.mxu0 0.0
    %443 = vmatmul.mubr.f32.gmra.mrb[0].mxu0 %v299
    %v444 = vpop.f32.mrb[0].mxu0
    %v445 = vadd.f32 0.0, %v444
    %v446 = vpop.f32.mrb[0].mxu0
    %447 = vdwg.mxu0
    %v448 = vadd.f32 %v377, %v445
    %v449 = vmax.f32 %v448, 0.0
    %v451 = vsel %vm149, %v376, 0
    %453 = vmatprep.subr.mxu0 0.0
    %454 = vmatpush1.msra.mxu0 %v51
    %455 = vmatprep.subr.mxu0 0.0
    %456 = vmatpush1.msra.mxu0 %v52
    %457 = vmatprep.subr.mxu0 0.0
    %458 = vmatpush1.msra.mxu0 %v53
    %459 = vmatprep.subr.mxu0 0.0
    %460 = vmatpush1.msra.mxu0 %v54
    %461 = vmatprep.subr.mxu0 0.0
    %462 = vmatpush1.msra.mxu0 0.0
    %463 = vmatprep.subr.mxu0 0.0
    %464 = vmatpush1.msra.mxu0 0.0
    %465 = vmatprep.subr.mxu0 0.0
    %466 = vmatpush1.msra.mxu0 0.0
    %467 = vmatprep.subr.mxu0 0.0
    %468 = vmatpush1.msra.mxu0 0.0
    %469 = vmatprep.subr.mxu0 0.0
    %470 = vmatpush1.msra.mxu0 0.0
    %471 = vmatprep.subr.mxu0 0.0
    %472 = vmatpush1.msra.mxu0 0.0
    %473 = vmatprep.subr.mxu0 0.0
    %474 = vmatpush1.msra.mxu0 0.0
    %475 = vmatprep.subr.mxu0 0.0
    %476 = vmatpush1.msra.mxu0 0.0
    %477 = vmatprep.subr.mxu0 0.0
    %478 = vmatpush1.msra.mxu0 0.0
    %479 = vmatprep.subr.mxu0 0.0
    %480 = vmatpush1.msra.mxu0 0.0
    %481 = vmatprep.subr.mxu0 0.0
    %482 = vmatpush1.msra.mxu0 0.0
    %483 = vmatprep.subr.mxu0 0.0
    %484 = vmatpush1.msra.mxu0 0.0
    %485 = vmatprep.subr.mxu0 0.0
    %486 = vmatpush1.msra.mxu0 0.0
    %487 = vmatprep.subr.mxu0 0.0
    %488 = vmatpush1.msra.mxu0 0.0
    %489 = vmatprep.subr.mxu0 0.0
    %490 = vmatpush1.msra.mxu0 0.0
    %491 = vmatprep.subr.mxu0 0.0
    %492 = vmatpush1.msra.mxu0 0.0
    %493 = vmatprep.subr.mxu0 0.0
    %494 = vmatpush1.msra.mxu0 0.0
    %495 = vmatprep.subr.mxu0 0.0
    %496 = vmatpush1.msra.mxu0 0.0
    %497 = vmatprep.subr.mxu0 0.0
    %498 = vmatpush1.msra.mxu0 0.0
    %499 = vmatprep.subr.mxu0 0.0
    %500 = vmatpush1.msra.mxu0 0.0
    %501 = vmatprep.subr.mxu0 0.0
    %502 = vmatpush1.msra.mxu0 0.0
    %503 = vmatprep.subr.mxu0 0.0
    %504 = vmatpush1.msra.mxu0 0.0
    %505 = vmatprep.subr.mxu0 0.0
    %506 = vmatpush1.msra.mxu0 0.0
    %507 = vmatprep.subr.mxu0 0.0
    %508 = vmatpush1.msra.mxu0 0.0
    %509 = vmatprep.subr.mxu0 0.0
    %510 = vmatpush1.msra.mxu0 0.0
    %511 = vmatprep.subr.mxu0 0.0
    %512 = vmatpush1.msra.mxu0 0.0
    %513 = vmatprep.subr.mxu0 0.0
    %514 = vmatpush1.msra.mxu0 0.0
    %515 = vmatprep.subr.mxu0 0.0
    %516 = vmatpush1.msra.mxu0 0.0
    %517 = vmatprep.mubr.f32.mxu0 0.0
    %518 = vmatmul.mubr.f32.gmra.mrb[0].mxu0 %v451
    %v519 = vpop.f32.mrb[0].mxu0
    %v520 = vadd.f32 0.0, %v519
    %v521 = vpop.f32.mrb[0].mxu0
    %522 = vdwg.mxu0
    %v524 = vsel %vm149, %v449, 0
    %526 = vmatprep.subr.mxu0 0.0
    %527 = vmatpush1.msra.mxu0 %v47
    %528 = vmatprep.subr.mxu0 0.0
    %529 = vmatpush1.msra.mxu0 %v48
    %530 = vmatprep.subr.mxu0 0.0
    %531 = vmatpush1.msra.mxu0 %v49
    %532 = vmatprep.subr.mxu0 0.0
    %533 = vmatpush1.msra.mxu0 %v50
    %534 = vmatprep.subr.mxu0 0.0
    %535 = vmatpush1.msra.mxu0 0.0
    %536 = vmatprep.subr.mxu0 0.0
    %537 = vmatpush1.msra.mxu0 0.0
    %538 = vmatprep.subr.mxu0 0.0
    %539 = vmatpush1.msra.mxu0 0.0
    %540 = vmatprep.subr.mxu0 0.0
    %541 = vmatpush1.msra.mxu0 0.0
    %542 = vmatprep.subr.mxu0 0.0
    %543 = vmatpush1.msra.mxu0 0.0
    %544 = vmatprep.subr.mxu0 0.0
    %545 = vmatpush1.msra.mxu0 0.0
    %546 = vmatprep.subr.mxu0 0.0
    %547 = vmatpush1.msra.mxu0 0.0
    %548 = vmatprep.subr.mxu0 0.0
    %549 = vmatpush1.msra.mxu0 0.0
    %550 = vmatprep.subr.mxu0 0.0
    %551 = vmatpush1.msra.mxu0 0.0
    %552 = vmatprep.subr.mxu0 0.0
    %553 = vmatpush1.msra.mxu0 0.0
    %554 = vmatprep.subr.mxu0 0.0
    %555 = vmatpush1.msra.mxu0 0.0
    %556 = vmatprep.subr.mxu0 0.0
    %557 = vmatpush1.msra.mxu0 0.0
    %558 = vmatprep.subr.mxu0 0.0
    %559 = vmatpush1.msra.mxu0 0.0
    %560 = vmatprep.subr.mxu0 0.0
    %561 = vmatpush1.msra.mxu0 0.0
    %562 = vmatprep.subr.mxu0 0.0
    %563 = vmatpush1.msra.mxu0 0.0
    %564 = vmatprep.subr.mxu0 0.0
    %565 = vmatpush1.msra.mxu0 0.0
    %566 = vmatprep.subr.mxu0 0.0
    %567 = vmatpush1.msra.mxu0 0.0
    %568 = vmatprep.subr.mxu0 0.0
    %569 = vmatpush1.msra.mxu0 0.0
    %570 = vmatprep.subr.mxu0 0.0
    %571 = vmatpush1.msra.mxu0 0.0
    %572 = vmatprep.subr.mxu0 0.0
    %573 = vmatpush1.msra.mxu0 0.0
    %574 = vmatprep.subr.mxu0 0.0
    %575 = vmatpush1.msra.mxu0 0.0
    %576 = vmatprep.subr.mxu0 0.0
    %577 = vmatpush1.msra.mxu0 0.0
    %578 = vmatprep.subr.mxu0 0.0
    %579 = vmatpush1.msra.mxu0 0.0
    %580 = vmatprep.subr.mxu0 0.0
    %581 = vmatpush1.msra.mxu0 0.0
    %582 = vmatprep.subr.mxu0 0.0
    %583 = vmatpush1.msra.mxu0 0.0
    %584 = vmatprep.subr.mxu0 0.0
    %585 = vmatpush1.msra.mxu0 0.0
    %586 = vmatprep.subr.mxu0 0.0
    %587 = vmatpush1.msra.mxu0 0.0
    %588 = vmatprep.subr.mxu0 0.0
    %589 = vmatpush1.msra.mxu0 0.0
    %590 = vmatprep.mubr.f32.mxu0 0.0
    %591 = vmatmul.mubr.f32.gmra.mrb[0].mxu0 %v524
    %v592 = vpop.f32.mrb[0].mxu0
    %v593 = vadd.f32 %v520, %v592
    %v594 = vpop.f32.mrb[0].mxu0
    %595 = vdwg.mxu0
    %v596 = vadd.f32 %v593, %v374
    %v597 = vmax.f32 %v596, 0.0
    %v598 = vld [vmem:[#allocation2 + $0x4] sm:$0x3]
    %599 = vmatprep.subr.mxu0 0.0
    %600 = vmatpush1.msra.mxu0 %v43
    %601 = vmatprep.subr.mxu0 0.0
    %602 = vmatpush1.msra.mxu0 %v44
    %603 = vmatprep.subr.mxu0 0.0
    %604 = vmatpush1.msra.mxu0 %v45
    %605 = vmatprep.subr.mxu0 0.0
    %606 = vmatpush1.msra.mxu0 %v46
    %607 = vmatprep.subr.mxu0 0.0
    %608 = vmatpush1.msra.mxu0 0.0
    %609 = vmatprep.subr.mxu0 0.0
    %610 = vmatpush1.msra.mxu0 0.0
    %611 = vmatprep.subr.mxu0 0.0
    %612 = vmatpush1.msra.mxu0 0.0
    %613 = vmatprep.subr.mxu0 0.0
    %614 = vmatpush1.msra.mxu0 0.0
    %615 = vmatprep.subr.mxu0 0.0
    %616 = vmatpush1.msra.mxu0 0.0
    %617 = vmatprep.subr.mxu0 0.0
    %618 = vmatpush1.msra.mxu0 0.0
    %619 = vmatprep.subr.mxu0 0.0
    %620 = vmatpush1.msra.mxu0 0.0
    %621 = vmatprep.subr.mxu0 0.0
    %622 = vmatpush1.msra.mxu0 0.0
    %623 = vmatprep.subr.mxu0 0.0
    %624 = vmatpush1.msra.mxu0 0.0
    %625 = vmatprep.subr.mxu0 0.0
    %626 = vmatpush1.msra.mxu0 0.0
    %627 = vmatprep.subr.mxu0 0.0
    %628 = vmatpush1.msra.mxu0 0.0
    %629 = vmatprep.subr.mxu0 0.0
    %630 = vmatpush1.msra.mxu0 0.0
    %631 = vmatprep.subr.mxu0 0.0
    %632 = vmatpush1.msra.mxu0 0.0
    %633 = vmatprep.subr.mxu0 0.0
    %634 = vmatpush1.msra.mxu0 0.0
    %635 = vmatprep.subr.mxu0 0.0
    %636 = vmatpush1.msra.mxu0 0.0
    %637 = vmatprep.subr.mxu0 0.0
    %638 = vmatpush1.msra.mxu0 0.0
    %639 = vmatprep.subr.mxu0 0.0
    %640 = vmatpush1.msra.mxu0 0.0
    %641 = vmatprep.subr.mxu0 0.0
    %642 = vmatpush1.msra.mxu0 0.0
    %643 = vmatprep.subr.mxu0 0.0
    %644 = vmatpush1.msra.mxu0 0.0
    %645 = vmatprep.subr.mxu0 0.0
    %646 = vmatpush1.msra.mxu0 0.0
    %647 = vmatprep.subr.mxu0 0.0
    %648 = vmatpush1.msra.mxu0 0.0
    %649 = vmatprep.subr.mxu0 0.0
    %650 = vmatpush1.msra.mxu0 0.0
    %651 = vmatprep.subr.mxu0 0.0
    %652 = vmatpush1.msra.mxu0 0.0
    %653 = vmatprep.subr.mxu0 0.0
    %654 = vmatpush1.msra.mxu0 0.0
    %655 = vmatprep.subr.mxu0 0.0
    %656 = vmatpush1.msra.mxu0 0.0
    %657 = vmatprep.subr.mxu0 0.0
    %658 = vmatpush1.msra.mxu0 0.0
    %659 = vmatprep.subr.mxu0 0.0
    %660 = vmatpush1.msra.mxu0 0.0
    %661 = vmatprep.subr.mxu0 0.0
    %662 = vmatpush1.msra.mxu0 0.0
    %663 = vmatprep.mubr.f32.mxu0 0.0
    %664 = vmatmul.mubr.f32.gmra.mrb[0].mxu0 %v524
    %v665 = vpop.f32.mrb[0].mxu0
    %v666 = vadd.f32 0.0, %v665
    %v667 = vpop.f32.mrb[0].mxu0
    %668 = vdwg.mxu0
    %v669 = vadd.f32 %v598, %v666
    %v670 = vmax.f32 %v669, 0.0
    %v672 = vsel %vm149, %v597, 0
    %674 = vmatprep.subr.mxu0 0.0
    %675 = vmatpush1.msra.mxu0 %v51
    %676 = vmatprep.subr.mxu0 0.0
    %677 = vmatpush1.msra.mxu0 %v52
    %678 = vmatprep.subr.mxu0 0.0
    %679 = vmatpush1.msra.mxu0 %v53
    %680 = vmatprep.subr.mxu0 0.0
    %681 = vmatpush1.msra.mxu0 %v54
    %682 = vmatprep.subr.mxu0 0.0
    %683 = vmatpush1.msra.mxu0 0.0
    %684 = vmatprep.subr.mxu0 0.0
    %685 = vmatpush1.msra.mxu0 0.0
    %686 = vmatprep.subr.mxu0 0.0
    %687 = vmatpush1.msra.mxu0 0.0
    %688 = vmatprep.subr.mxu0 0.0
    %689 = vmatpush1.msra.mxu0 0.0
    %690 = vmatprep.subr.mxu0 0.0
    %691 = vmatpush1.msra.mxu0 0.0
    %692 = vmatprep.subr.mxu0 0.0
    %693 = vmatpush1.msra.mxu0 0.0
    %694 = vmatprep.subr.mxu0 0.0
    %695 = vmatpush1.msra.mxu0 0.0
    %696 = vmatprep.subr.mxu0 0.0
    %697 = vmatpush1.msra.mxu0 0.0
    %698 = vmatprep.subr.mxu0 0.0
    %699 = vmatpush1.msra.mxu0 0.0
    %700 = vmatprep.subr.mxu0 0.0
    %701 = vmatpush1.msra.mxu0 0.0
    %702 = vmatprep.subr.mxu0 0.0
    %703 = vmatpush1.msra.mxu0 0.0
    %704 = vmatprep.subr.mxu0 0.0
    %705 = vmatpush1.msra.mxu0 0.0
    %706 = vmatprep.subr.mxu0 0.0
    %707 = vmatpush1.msra.mxu0 0.0
    %708 = vmatprep.subr.mxu0 0.0
    %709 = vmatpush1.msra.mxu0 0.0
    %710 = vmatprep.subr.mxu0 0.0
    %711 = vmatpush1.msra.mxu0 0.0
    %712 = vmatprep.subr.mxu0 0.0
    %713 = vmatpush1.msra.mxu0 0.0
    %714 = vmatprep.subr.mxu0 0.0
    %715 = vmatpush1.msra.mxu0 0.0
    %716 = vmatprep.subr.mxu0 0.0
    %717 = vmatpush1.msra.mxu0 0.0
    %718 = vmatprep.subr.mxu0 0.0
    %719 = vmatpush1.msra.mxu0 0.0
    %720 = vmatprep.subr.mxu0 0.0
    %721 = vmatpush1.msra.mxu0 0.0
    %722 = vmatprep.subr.mxu0 0.0
    %723 = vmatpush1.msra.mxu0 0.0
    %724 = vmatprep.subr.mxu0 0.0
    %725 = vmatpush1.msra.mxu0 0.0
    %726 = vmatprep.subr.mxu0 0.0
    %727 = vmatpush1.msra.mxu0 0.0
    %728 = vmatprep.subr.mxu0 0.0
    %729 = vmatpush1.msra.mxu0 0.0
    %730 = vmatprep.subr.mxu0 0.0
    %731 = vmatpush1.msra.mxu0 0.0
    %732 = vmatprep.subr.mxu0 0.0
    %733 = vmatpush1.msra.mxu0 0.0
    %734 = vmatprep.subr.mxu0 0.0
    %735 = vmatpush1.msra.mxu0 0.0
    %736 = vmatprep.subr.mxu0 0.0
    %737 = vmatpush1.msra.mxu0 0.0
    %738 = vmatprep.mubr.f32.mxu0 0.0
    %739 = vmatmul.mubr.f32.gmra.mrb[0].mxu0 %v672
    %v740 = vpop.f32.mrb[0].mxu0
    %v741 = vadd.f32 0.0, %v740
    %v742 = vpop.f32.mrb[0].mxu0
    %743 = vdwg.mxu0
    %v745 = vsel %vm149, %v670, 0
    %747 = vmatprep.subr.mxu0 0.0
    %748 = vmatpush1.msra.mxu0 %v47
    %749 = vmatprep.subr.mxu0 0.0
    %750 = vmatpush1.msra.mxu0 %v48
    %751 = vmatprep.subr.mxu0 0.0
    %752 = vmatpush1.msra.mxu0 %v49
    %753 = vmatprep.subr.mxu0 0.0
    %754 = vmatpush1.msra.mxu0 %v50
    %755 = vmatprep.subr.mxu0 0.0
    %756 = vmatpush1.msra.mxu0 0.0
    %757 = vmatprep.subr.mxu0 0.0
    %758 = vmatpush1.msra.mxu0 0.0
    %759 = vmatprep.subr.mxu0 0.0
    %760 = vmatpush1.msra.mxu0 0.0
    %761 = vmatprep.subr.mxu0 0.0
    %762 = vmatpush1.msra.mxu0 0.0
    %763 = vmatprep.subr.mxu0 0.0
    %764 = vmatpush1.msra.mxu0 0.0
    %765 = vmatprep.subr.mxu0 0.0
    %766 = vmatpush1.msra.mxu0 0.0
    %767 = vmatprep.subr.mxu0 0.0
    %768 = vmatpush1.msra.mxu0 0.0
    %769 = vmatprep.subr.mxu0 0.0
    %770 = vmatpush1.msra.mxu0 0.0
    %771 = vmatprep.subr.mxu0 0.0
    %772 = vmatpush1.msra.mxu0 0.0
    %773 = vmatprep.subr.mxu0 0.0
    %774 = vmatpush1.msra.mxu0 0.0
    %775 = vmatprep.subr.mxu0 0.0
    %776 = vmatpush1.msra.mxu0 0.0
    %777 = vmatprep.subr.mxu0 0.0
    %778 = vmatpush1.msra.mxu0 0.0
    %779 = vmatprep.subr.mxu0 0.0
    %780 = vmatpush1.msra.mxu0 0.0
    %781 = vmatprep.subr.mxu0 0.0
    %782 = vmatpush1.msra.mxu0 0.0
    %783 = vmatprep.subr.mxu0 0.0
    %784 = vmatpush1.msra.mxu0 0.0
    %785 = vmatprep.subr.mxu0 0.0
    %786 = vmatpush1.msra.mxu0 0.0
    %787 = vmatprep.subr.mxu0 0.0
    %788 = vmatpush1.msra.mxu0 0.0
    %789 = vmatprep.subr.mxu0 0.0
    %790 = vmatpush1.msra.mxu0 0.0
    %791 = vmatprep.subr.mxu0 0.0
    %792 = vmatpush1.msra.mxu0 0.0
    %793 = vmatprep.subr.mxu0 0.0
    %794 = vmatpush1.msra.mxu0 0.0
    %795 = vmatprep.subr.mxu0 0.0
    %796 = vmatpush1.msra.mxu0 0.0
    %797 = vmatprep.subr.mxu0 0.0
    %798 = vmatpush1.msra.mxu0 0.0
    %799 = vmatprep.subr.mxu0 0.0
    %800 = vmatpush1.msra.mxu0 0.0
    %801 = vmatprep.subr.mxu0 0.0
    %802 = vmatpush1.msra.mxu0 0.0
    %803 = vmatprep.subr.mxu0 0.0
    %804 = vmatpush1.msra.mxu0 0.0
    %805 = vmatprep.subr.mxu0 0.0
    %806 = vmatpush1.msra.mxu0 0.0
    %807 = vmatprep.subr.mxu0 0.0
    %808 = vmatpush1.msra.mxu0 0.0
    %809 = vmatprep.subr.mxu0 0.0
    %810 = vmatpush1.msra.mxu0 0.0
    %811 = vmatprep.mubr.f32.mxu0 0.0
    %812 = vmatmul.mubr.f32.gmra.mrb[0].mxu0 %v745
    %v813 = vpop.f32.mrb[0].mxu0
    %v814 = vadd.f32 %v741, %v813
    %v815 = vpop.f32.mrb[0].mxu0
    %816 = vdwg.mxu0
    %v817 = vadd.f32 %v814, %v374
    %v818 = vmax.f32 %v817, 0.0
    %v819 = vld [vmem:[#allocation2 + $0x6] sm:$0x3]
    %820 = vmatprep.subr.mxu0 0.0
    %821 = vmatpush1.msra.mxu0 %v43
    %822 = vmatprep.subr.mxu0 0.0
    %823 = vmatpush1.msra.mxu0 %v44
    %824 = vmatprep.subr.mxu0 0.0
    %825 = vmatpush1.msra.mxu0 %v45
    %826 = vmatprep.subr.mxu0 0.0
    %827 = vmatpush1.msra.mxu0 %v46
    %828 = vmatprep.subr.mxu0 0.0
    %829 = vmatpush1.msra.mxu0 0.0
    %830 = vmatprep.subr.mxu0 0.0
    %831 = vmatpush1.msra.mxu0 0.0
    %832 = vmatprep.subr.mxu0 0.0
    %833 = vmatpush1.msra.mxu0 0.0
    %834 = vmatprep.subr.mxu0 0.0
    %835 = vmatpush1.msra.mxu0 0.0
    %836 = vmatprep.subr.mxu0 0.0
    %837 = vmatpush1.msra.mxu0 0.0
    %838 = vmatprep.subr.mxu0 0.0
    %839 = vmatpush1.msra.mxu0 0.0
    %840 = vmatprep.subr.mxu0 0.0
    %841 = vmatpush1.msra.mxu0 0.0
    %842 = vmatprep.subr.mxu0 0.0
    %843 = vmatpush1.msra.mxu0 0.0
    %844 = vmatprep.subr.mxu0 0.0
    %845 = vmatpush1.msra.mxu0 0.0
    %846 = vmatprep.subr.mxu0 0.0
    %847 = vmatpush1.msra.mxu0 0.0
    %848 = vmatprep.subr.mxu0 0.0
    %849 = vmatpush1.msra.mxu0 0.0
    %850 = vmatprep.subr.mxu0 0.0
    %851 = vmatpush1.msra.mxu0 0.0
    %852 = vmatprep.subr.mxu0 0.0
    %853 = vmatpush1.msra.mxu0 0.0
    %854 = vmatprep.subr.mxu0 0.0
    %855 = vmatpush1.msra.mxu0 0.0
    %856 = vmatprep.subr.mxu0 0.0
    %857 = vmatpush1.msra.mxu0 0.0
    %858 = vmatprep.subr.mxu0 0.0
    %859 = vmatpush1.msra.mxu0 0.0
    %860 = vmatprep.subr.mxu0 0.0
    %861 = vmatpush1.msra.mxu0 0.0
    %862 = vmatprep.subr.mxu0 0.0
    %863 = vmatpush1.msra.mxu0 0.0
    %864 = vmatprep.subr.mxu0 0.0
    %865 = vmatpush1.msra.mxu0 0.0
    %866 = vmatprep.subr.mxu0 0.0
    %867 = vmatpush1.msra.mxu0 0.0
    %868 = vmatprep.subr.mxu0 0.0
    %869 = vmatpush1.msra.mxu0 0.0
    %870 = vmatprep.subr.mxu0 0.0
    %871 = vmatpush1.msra.mxu0 0.0
    %872 = vmatprep.subr.mxu0 0.0
    %873 = vmatpush1.msra.mxu0 0.0
    %874 = vmatprep.subr.mxu0 0.0
    %875 = vmatpush1.msra.mxu0 0.0
    %876 = vmatprep.subr.mxu0 0.0
    %877 = vmatpush1.msra.mxu0 0.0
    %878 = vmatprep.subr.mxu0 0.0
    %879 = vmatpush1.msra.mxu0 0.0
    %880 = vmatprep.subr.mxu0 0.0
    %881 = vmatpush1.msra.mxu0 0.0
    %882 = vmatprep.subr.mxu0 0.0
    %883 = vmatpush1.msra.mxu0 0.0
    %884 = vmatprep.mubr.f32.mxu0 0.0
    %885 = vmatmul.mubr.f32.gmra.mrb[0].mxu0 %v745
    %v886 = vpop.f32.mrb[0].mxu0
    %v887 = vadd.f32 0.0, %v886
    %v888 = vpop.f32.mrb[0].mxu0
    %889 = vdwg.mxu0
    %v890 = vadd.f32 %v819, %v887
    %v891 = vmax.f32 %v890, 0.0
    %v893 = vsel %vm149, %v818, 0
    %895 = vmatprep.subr.mxu0 0.0
    %896 = vmatpush1.msra.mxu0 %v51
    %897 = vmatprep.subr.mxu0 0.0
    %898 = vmatpush1.msra.mxu0 %v52
    %899 = vmatprep.subr.mxu0 0.0
    %900 = vmatpush1.msra.mxu0 %v53
    %901 = vmatprep.subr.mxu0 0.0
    %902 = vmatpush1.msra.mxu0 %v54
    %903 = vmatprep.subr.mxu0 0.0
    %904 = vmatpush1.msra.mxu0 0.0
    %905 = vmatprep.subr.mxu0 0.0
    %906 = vmatpush1.msra.mxu0 0.0
    %907 = vmatprep.subr.mxu0 0.0
    %908 = vmatpush1.msra.mxu0 0.0
    %909 = vmatprep.subr.mxu0 0.0
    %910 = vmatpush1.msra.mxu0 0.0
    %911 = vmatprep.subr.mxu0 0.0
    %912 = vmatpush1.msra.mxu0 0.0
    %913 = vmatprep.subr.mxu0 0.0
    %914 = vmatpush1.msra.mxu0 0.0
    %915 = vmatprep.subr.mxu0 0.0
    %916 = vmatpush1.msra.mxu0 0.0
    %917 = vmatprep.subr.mxu0 0.0
    %918 = vmatpush1.msra.mxu0 0.0
    %919 = vmatprep.subr.mxu0 0.0
    %920 = vmatpush1.msra.mxu0 0.0
    %921 = vmatprep.subr.mxu0 0.0
    %922 = vmatpush1.msra.mxu0 0.0
    %923 = vmatprep.subr.mxu0 0.0
    %924 = vmatpush1.msra.mxu0 0.0
    %925 = vmatprep.subr.mxu0 0.0
    %926 = vmatpush1.msra.mxu0 0.0
    %927 = vmatprep.subr.mxu0 0.0
    %928 = vmatpush1.msra.mxu0 0.0
    %929 = vmatprep.subr.mxu0 0.0
    %930 = vmatpush1.msra.mxu0 0.0
    %931 = vmatprep.subr.mxu0 0.0
    %932 = vmatpush1.msra.mxu0 0.0
    %933 = vmatprep.subr.mxu0 0.0
    %934 = vmatpush1.msra.mxu0 0.0
    %935 = vmatprep.subr.mxu0 0.0
    %936 = vmatpush1.msra.mxu0 0.0
    %937 = vmatprep.subr.mxu0 0.0
    %938 = vmatpush1.msra.mxu0 0.0
    %939 = vmatprep.subr.mxu0 0.0
    %940 = vmatpush1.msra.mxu0 0.0
    %941 = vmatprep.subr.mxu0 0.0
    %942 = vmatpush1.msra.mxu0 0.0
    %943 = vmatprep.subr.mxu0 0.0
    %944 = vmatpush1.msra.mxu0 0.0
    %945 = vmatprep.subr.mxu0 0.0
    %946 = vmatpush1.msra.mxu0 0.0
    %947 = vmatprep.subr.mxu0 0.0
    %948 = vmatpush1.msra.mxu0 0.0
    %949 = vmatprep.subr.mxu0 0.0
    %950 = vmatpush1.msra.mxu0 0.0
    %951 = vmatprep.subr.mxu0 0.0
    %952 = vmatpush1.msra.mxu0 0.0
    %953 = vmatprep.subr.mxu0 0.0
    %954 = vmatpush1.msra.mxu0 0.0
    %955 = vmatprep.subr.mxu0 0.0
    %956 = vmatpush1.msra.mxu0 0.0
    %957 = vmatprep.subr.mxu0 0.0
    %958 = vmatpush1.msra.mxu0 0.0
    %959 = vmatprep.mubr.f32.mxu0 0.0
    %960 = vmatmul.mubr.f32.gmra.mrb[0].mxu0 %v893
    %v961 = vpop.f32.mrb[0].mxu0
    %v962 = vadd.f32 0.0, %v961
    %v963 = vpop.f32.mrb[0].mxu0
    %964 = vdwg.mxu0
    %v966 = vsel %vm149, %v891, 0
    %968 = vmatprep.subr.mxu0 0.0
    %969 = vmatpush1.msra.mxu0 %v47
    %970 = vmatprep.subr.mxu0 0.0
    %971 = vmatpush1.msra.mxu0 %v48
    %972 = vmatprep.subr.mxu0 0.0
    %973 = vmatpush1.msra.mxu0 %v49
    %974 = vmatprep.subr.mxu0 0.0
    %975 = vmatpush1.msra.mxu0 %v50
    %976 = vmatprep.subr.mxu0 0.0
    %977 = vmatpush1.msra.mxu0 0.0
    %978 = vmatprep.subr.mxu0 0.0
    %979 = vmatpush1.msra.mxu0 0.0
    %980 = vmatprep.subr.mxu0 0.0
    %981 = vmatpush1.msra.mxu0 0.0
    %982 = vmatprep.subr.mxu0 0.0
    %983 = vmatpush1.msra.mxu0 0.0
    %984 = vmatprep.subr.mxu0 0.0
    %985 = vmatpush1.msra.mxu0 0.0
    %986 = vmatprep.subr.mxu0 0.0
    %987 = vmatpush1.msra.mxu0 0.0
    %988 = vmatprep.subr.mxu0 0.0
    %989 = vmatpush1.msra.mxu0 0.0
    %990 = vmatprep.subr.mxu0 0.0
    %991 = vmatpush1.msra.mxu0 0.0
    %992 = vmatprep.subr.mxu0 0.0
    %993 = vmatpush1.msra.mxu0 0.0
    %994 = vmatprep.subr.mxu0 0.0
    %995 = vmatpush1.msra.mxu0 0.0
    %996 = vmatprep.subr.mxu0 0.0
    %997 = vmatpush1.msra.mxu0 0.0
    %998 = vmatprep.subr.mxu0 0.0
    %999 = vmatpush1.msra.mxu0 0.0
    %1000 = vmatprep.subr.mxu0 0.0
    %1001 = vmatpush1.msra.mxu0 0.0
    %1002 = vmatprep.subr.mxu0 0.0
    %1003 = vmatpush1.msra.mxu0 0.0
    %1004 = vmatprep.subr.mxu0 0.0
    %1005 = vmatpush1.msra.mxu0 0.0
    %1006 = vmatprep.subr.mxu0 0.0
    %1007 = vmatpush1.msra.mxu0 0.0
    %1008 = vmatprep.subr.mxu0 0.0
    %1009 = vmatpush1.msra.mxu0 0.0
    %1010 = vmatprep.subr.mxu0 0.0
    %1011 = vmatpush1.msra.mxu0 0.0
    %1012 = vmatprep.subr.mxu0 0.0
    %1013 = vmatpush1.msra.mxu0 0.0
    %1014 = vmatprep.subr.mxu0 0.0
    %1015 = vmatpush1.msra.mxu0 0.0
    %1016 = vmatprep.subr.mxu0 0.0
    %1017 = vmatpush1.msra.mxu0 0.0
    %1018 = vmatprep.subr.mxu0 0.0
    %1019 = vmatpush1.msra.mxu0 0.0
    %1020 = vmatprep.subr.mxu0 0.0
    %1021 = vmatpush1.msra.mxu0 0.0
    %1022 = vmatprep.subr.mxu0 0.0
    %1023 = vmatpush1.msra.mxu0 0.0
    %1024 = vmatprep.subr.mxu0 0.0
    %1025 = vmatpush1.msra.mxu0 0.0
    %1026 = vmatprep.subr.mxu0 0.0
    %1027 = vmatpush1.msra.mxu0 0.0
    %1028 = vmatprep.subr.mxu0 0.0
    %1029 = vmatpush1.msra.mxu0 0.0
    %1030 = vmatprep.subr.mxu0 0.0
    %1031 = vmatpush1.msra.mxu0 0.0
    %1032 = vmatprep.mubr.f32.mxu0 0.0
    %1033 = vmatmul.mubr.f32.gmra.mrb[0].mxu0 %v966
    %v1034 = vpop.f32.mrb[0].mxu0
    %v1035 = vadd.f32 %v962, %v1034
    %v1036 = vpop.f32.mrb[0].mxu0
    %1037 = vdwg.mxu0
    %v1038 = vadd.f32 %v1035, %v374
    %v1039 = vmax.f32 %v1038, 0.0
    %v1040 = vld [vmem:[#allocation2 + $0x8] sm:$0x3]
    %1041 = vmatprep.subr.mxu0 0.0
    %1042 = vmatpush1.msra.mxu0 %v43
    %1043 = vmatprep.subr.mxu0 0.0
    %1044 = vmatpush1.msra.mxu0 %v44
    %1045 = vmatprep.subr.mxu0 0.0
    %1046 = vmatpush1.msra.mxu0 %v45
    %1047 = vmatprep.subr.mxu0 0.0
    %1048 = vmatpush1.msra.mxu0 %v46
    %1049 = vmatprep.subr.mxu0 0.0
    %1050 = vmatpush1.msra.mxu0 0.0
    %1051 = vmatprep.subr.mxu0 0.0
    %1052 = vmatpush1.msra.mxu0 0.0
    %1053 = vmatprep.subr.mxu0 0.0
    %1054 = vmatpush1.msra.mxu0 0.0
    %1055 = vmatprep.subr.mxu0 0.0
    %1056 = vmatpush1.msra.mxu0 0.0
    %1057 = vmatprep.subr.mxu0 0.0
    %1058 = vmatpush1.msra.mxu0 0.0
    %1059 = vmatprep.subr.mxu0 0.0
    %1060 = vmatpush1.msra.mxu0 0.0
    %1061 = vmatprep.subr.mxu0 0.0
    %1062 = vmatpush1.msra.mxu0 0.0
    %1063 = vmatprep.subr.mxu0 0.0
    %1064 = vmatpush1.msra.mxu0 0.0
    %1065 = vmatprep.subr.mxu0 0.0
    %1066 = vmatpush1.msra.mxu0 0.0
    %1067 = vmatprep.subr.mxu0 0.0
    %1068 = vmatpush1.msra.mxu0 0.0
    %1069 = vmatprep.subr.mxu0 0.0
    %1070 = vmatpush1.msra.mxu0 0.0
    %1071 = vmatprep.subr.mxu0 0.0
    %1072 = vmatpush1.msra.mxu0 0.0
    %1073 = vmatprep.subr.mxu0 0.0
    %1074 = vmatpush1.msra.mxu0 0.0
    %1075 = vmatprep.subr.mxu0 0.0
    %1076 = vmatpush1.msra.mxu0 0.0
    %1077 = vmatprep.subr.mxu0 0.0
    %1078 = vmatpush1.msra.mxu0 0.0
    %1079 = vmatprep.subr.mxu0 0.0
    %1080 = vmatpush1.msra.mxu0 0.0
    %1081 = vmatprep.subr.mxu0 0.0
    %1082 = vmatpush1.msra.mxu0 0.0
    %1083 = vmatprep.subr.mxu0 0.0
    %1084 = vmatpush1.msra.mxu0 0.0
    %1085 = vmatprep.subr.mxu0 0.0
    %1086 = vmatpush1.msra.mxu0 0.0
    %1087 = vmatprep.subr.mxu0 0.0
    %1088 = vmatpush1.msra.mxu0 0.0
    %1089 = vmatprep.subr.mxu0 0.0
    %1090 = vmatpush1.msra.mxu0 0.0
    %1091 = vmatprep.subr.mxu0 0.0
    %1092 = vmatpush1.msra.mxu0 0.0
    %1093 = vmatprep.subr.mxu0 0.0
    %1094 = vmatpush1.msra.mxu0 0.0
    %1095 = vmatprep.subr.mxu0 0.0
    %1096 = vmatpush1.msra.mxu0 0.0
    %1097 = vmatprep.subr.mxu0 0.0
    %1098 = vmatpush1.msra.mxu0 0.0
    %1099 = vmatprep.subr.mxu0 0.0
    %1100 = vmatpush1.msra.mxu0 0.0
    %1101 = vmatprep.subr.mxu0 0.0
    %1102 = vmatpush1.msra.mxu0 0.0
    %1103 = vmatprep.subr.mxu0 0.0
    %1104 = vmatpush1.msra.mxu0 0.0
    %1105 = vmatprep.mubr.f32.mxu0 0.0
    %1106 = vmatmul.mubr.f32.gmra.mrb[0].mxu0 %v966
    %v1107 = vpop.f32.mrb[0].mxu0
    %v1108 = vadd.f32 0.0, %v1107
    %v1109 = vpop.f32.mrb[0].mxu0
    %1110 = vdwg.mxu0
    %v1111 = vadd.f32 %v1040, %v1108
    %v1112 = vmax.f32 %v1111, 0.0
    %v1114 = vsel %vm149, %v1039, 0
    %1116 = vmatprep.subr.mxu0 0.0
    %1117 = vmatpush1.msra.mxu0 %v51
    %1118 = vmatprep.subr.mxu0 0.0
    %1119 = vmatpush1.msra.mxu0 %v52
    %1120 = vmatprep.subr.mxu0 0.0
    %1121 = vmatpush1.msra.mxu0 %v53
    %1122 = vmatprep.subr.mxu0 0.0
    %1123 = vmatpush1.msra.mxu0 %v54
    %1124 = vmatprep.subr.mxu0 0.0
    %1125 = vmatpush1.msra.mxu0 0.0
    %1126 = vmatprep.subr.mxu0 0.0
    %1127 = vmatpush1.msra.mxu0 0.0
    %1128 = vmatprep.subr.mxu0 0.0
    %1129 = vmatpush1.msra.mxu0 0.0
    %1130 = vmatprep.subr.mxu0 0.0
    %1131 = vmatpush1.msra.mxu0 0.0
    %1132 = vmatprep.subr.mxu0 0.0
    %1133 = vmatpush1.msra.mxu0 0.0
    %1134 = vmatprep.subr.mxu0 0.0
    %1135 = vmatpush1.msra.mxu0 0.0
    %1136 = vmatprep.subr.mxu0 0.0
    %1137 = vmatpush1.msra.mxu0 0.0
    %1138 = vmatprep.subr.mxu0 0.0
    %1139 = vmatpush1.msra.mxu0 0.0
    %1140 = vmatprep.subr.mxu0 0.0
    %1141 = vmatpush1.msra.mxu0 0.0
    %1142 = vmatprep.subr.mxu0 0.0
    %1143 = vmatpush1.msra.mxu0 0.0
    %1144 = vmatprep.subr.mxu0 0.0
    %1145 = vmatpush1.msra.mxu0 0.0
    %1146 = vmatprep.subr.mxu0 0.0
    %1147 = vmatpush1.msra.mxu0 0.0
    %1148 = vmatprep.subr.mxu0 0.0
    %1149 = vmatpush1.msra.mxu0 0.0
    %1150 = vmatprep.subr.mxu0 0.0
    %1151 = vmatpush1.msra.mxu0 0.0
    %1152 = vmatprep.subr.mxu0 0.0
    %1153 = vmatpush1.msra.mxu0 0.0
    %1154 = vmatprep.subr.mxu0 0.0
    %1155 = vmatpush1.msra.mxu0 0.0
    %1156 = vmatprep.subr.mxu0 0.0
    %1157 = vmatpush1.msra.mxu0 0.0
    %1158 = vmatprep.subr.mxu0 0.0
    %1159 = vmatpush1.msra.mxu0 0.0
    %1160 = vmatprep.subr.mxu0 0.0
    %1161 = vmatpush1.msra.mxu0 0.0
    %1162 = vmatprep.subr.mxu0 0.0
    %1163 = vmatpush1.msra.mxu0 0.0
    %1164 = vmatprep.subr.mxu0 0.0
    %1165 = vmatpush1.msra.mxu0 0.0
    %1166 = vmatprep.subr.mxu0 0.0
    %1167 = vmatpush1.msra.mxu0 0.0
    %1168 = vmatprep.subr.mxu0 0.0
    %1169 = vmatpush1.msra.mxu0 0.0
    %1170 = vmatprep.subr.mxu0 0.0
    %1171 = vmatpush1.msra.mxu0 0.0
    %1172 = vmatprep.subr.mxu0 0.0
    %1173 = vmatpush1.msra.mxu0 0.0
    %1174 = vmatprep.subr.mxu0 0.0
    %1175 = vmatpush1.msra.mxu0 0.0
    %1176 = vmatprep.subr.mxu0 0.0
    %1177 = vmatpush1.msra.mxu0 0.0
    %1178 = vmatprep.subr.mxu0 0.0
    %1179 = vmatpush1.msra.mxu0 0.0
    %1180 = vmatprep.mubr.f32.mxu0 0.0
    %1181 = vmatmul.mubr.f32.gmra.mrb[0].mxu0 %v1114
    %v1182 = vpop.f32.mrb[0].mxu0
    %v1183 = vadd.f32 0.0, %v1182
    %v1184 = vpop.f32.mrb[0].mxu0
    %1185 = vdwg.mxu0
    %v1187 = vsel %vm149, %v1112, 0
    %1189 = vmatprep.subr.mxu0 0.0
    %1190 = vmatpush1.msra.mxu0 %v47
    %1191 = vmatprep.subr.mxu0 0.0
    %1192 = vmatpush1.msra.mxu0 %v48
    %1193 = vmatprep.subr.mxu0 0.0
    %1194 = vmatpush1.msra.mxu0 %v49
    %1195 = vmatprep.subr.mxu0 0.0
    %1196 = vmatpush1.msra.mxu0 %v50
    %1197 = vmatprep.subr.mxu0 0.0
    %1198 = vmatpush1.msra.mxu0 0.0
    %1199 = vmatprep.subr.mxu0 0.0
    %1200 = vmatpush1.msra.mxu0 0.0
    %1201 = vmatprep.subr.mxu0 0.0
    %1202 = vmatpush1.msra.mxu0 0.0
    %1203 = vmatprep.subr.mxu0 0.0
    %1204 = vmatpush1.msra.mxu0 0.0
    %1205 = vmatprep.subr.mxu0 0.0
    %1206 = vmatpush1.msra.mxu0 0.0
    %1207 = vmatprep.subr.mxu0 0.0
    %1208 = vmatpush1.msra.mxu0 0.0
    %1209 = vmatprep.subr.mxu0 0.0
    %1210 = vmatpush1.msra.mxu0 0.0
    %1211 = vmatprep.subr.mxu0 0.0
    %1212 = vmatpush1.msra.mxu0 0.0
    %1213 = vmatprep.subr.mxu0 0.0
    %1214 = vmatpush1.msra.mxu0 0.0
    %1215 = vmatprep.subr.mxu0 0.0
    %1216 = vmatpush1.msra.mxu0 0.0
    %1217 = vmatprep.subr.mxu0 0.0
    %1218 = vmatpush1.msra.mxu0 0.0
    %1219 = vmatprep.subr.mxu0 0.0
    %1220 = vmatpush1.msra.mxu0 0.0
    %1221 = vmatprep.subr.mxu0 0.0
    %1222 = vmatpush1.msra.mxu0 0.0
    %1223 = vmatprep.subr.mxu0 0.0
    %1224 = vmatpush1.msra.mxu0 0.0
    %1225 = vmatprep.subr.mxu0 0.0
    %1226 = vmatpush1.msra.mxu0 0.0
    %1227 = vmatprep.subr.mxu0 0.0
    %1228 = vmatpush1.msra.mxu0 0.0
    %1229 = vmatprep.subr.mxu0 0.0
    %1230 = vmatpush1.msra.mxu0 0.0
    %1231 = vmatprep.subr.mxu0 0.0
    %1232 = vmatpush1.msra.mxu0 0.0
    %1233 = vmatprep.subr.mxu0 0.0
    %1234 = vmatpush1.msra.mxu0 0.0
    %1235 = vmatprep.subr.mxu0 0.0
    %1236 = vmatpush1.msra.mxu0 0.0
    %1237 = vmatprep.subr.mxu0 0.0
    %1238 = vmatpush1.msra.mxu0 0.0
    %1239 = vmatprep.subr.mxu0 0.0
    %1240 = vmatpush1.msra.mxu0 0.0
    %1241 = vmatprep.subr.mxu0 0.0
    %1242 = vmatpush1.msra.mxu0 0.0
    %1243 = vmatprep.subr.mxu0 0.0
    %1244 = vmatpush1.msra.mxu0 0.0
    %1245 = vmatprep.subr.mxu0 0.0
    %1246 = vmatpush1.msra.mxu0 0.0
    %1247 = vmatprep.subr.mxu0 0.0
    %1248 = vmatpush1.msra.mxu0 0.0
    %1249 = vmatprep.subr.mxu0 0.0
    %1250 = vmatpush1.msra.mxu0 0.0
    %1251 = vmatprep.subr.mxu0 0.0
    %1252 = vmatpush1.msra.mxu0 0.0
    %1253 = vmatprep.mubr.f32.mxu0 0.0
    %1254 = vmatmul.mubr.f32.gmra.mrb[0].mxu0 %v1187
    %v1255 = vpop.f32.mrb[0].mxu0
    %v1256 = vadd.f32 %v1183, %v1255
    %v1257 = vpop.f32.mrb[0].mxu0
    %1258 = vdwg.mxu0
    %v1259 = vadd.f32 %v1256, %v374
    %v1260 = vmax.f32 %v1259, 0.0
    %v1261 = vld [vmem:[#allocation2 + $0xa] sm:$0x3]
    %1262 = vmatprep.subr.mxu0 0.0
    %1263 = vmatpush1.msra.mxu0 %v43
    %1264 = vmatprep.subr.mxu0 0.0
    %1265 = vmatpush1.msra.mxu0 %v44
    %1266 = vmatprep.subr.mxu0 0.0
    %1267 = vmatpush1.msra.mxu0 %v45
    %1268 = vmatprep.subr.mxu0 0.0
    %1269 = vmatpush1.msra.mxu0 %v46
    %1270 = vmatprep.subr.mxu0 0.0
    %1271 = vmatpush1.msra.mxu0 0.0
    %1272 = vmatprep.subr.mxu0 0.0
    %1273 = vmatpush1.msra.mxu0 0.0
    %1274 = vmatprep.subr.mxu0 0.0
    %1275 = vmatpush1.msra.mxu0 0.0
    %1276 = vmatprep.subr.mxu0 0.0
    %1277 = vmatpush1.msra.mxu0 0.0
    %1278 = vmatprep.subr.mxu0 0.0
    %1279 = vmatpush1.msra.mxu0 0.0
    %1280 = vmatprep.subr.mxu0 0.0
    %1281 = vmatpush1.msra.mxu0 0.0
    %1282 = vmatprep.subr.mxu0 0.0
    %1283 = vmatpush1.msra.mxu0 0.0
    %1284 = vmatprep.subr.mxu0 0.0
    %1285 = vmatpush1.msra.mxu0 0.0
    %1286 = vmatprep.subr.mxu0 0.0
    %1287 = vmatpush1.msra.mxu0 0.0
    %1288 = vmatprep.subr.mxu0 0.0
    %1289 = vmatpush1.msra.mxu0 0.0
    %1290 = vmatprep.subr.mxu0 0.0
    %1291 = vmatpush1.msra.mxu0 0.0
    %1292 = vmatprep.subr.mxu0 0.0
    %1293 = vmatpush1.msra.mxu0 0.0
    %1294 = vmatprep.subr.mxu0 0.0
    %1295 = vmatpush1.msra.mxu0 0.0
    %1296 = vmatprep.subr.mxu0 0.0
    %1297 = vmatpush1.msra.mxu0 0.0
    %1298 = vmatprep.subr.mxu0 0.0
    %1299 = vmatpush1.msra.mxu0 0.0
    %1300 = vmatprep.subr.mxu0 0.0
    %1301 = vmatpush1.msra.mxu0 0.0
    %1302 = vmatprep.subr.mxu0 0.0
    %1303 = vmatpush1.msra.mxu0 0.0
    %1304 = vmatprep.subr.mxu0 0.0
    %1305 = vmatpush1.msra.mxu0 0.0
    %1306 = vmatprep.subr.mxu0 0.0
    %1307 = vmatpush1.msra.mxu0 0.0
    %1308 = vmatprep.subr.mxu0 0.0
    %1309 = vmatpush1.msra.mxu0 0.0
    %1310 = vmatprep.subr.mxu0 0.0
    %1311 = vmatpush1.msra.mxu0 0.0
    %1312 = vmatprep.subr.mxu0 0.0
    %1313 = vmatpush1.msra.mxu0 0.0
    %1314 = vmatprep.subr.mxu0 0.0
    %1315 = vmatpush1.msra.mxu0 0.0
    %1316 = vmatprep.subr.mxu0 0.0
    %1317 = vmatpush1.msra.mxu0 0.0
    %1318 = vmatprep.subr.mxu0 0.0
    %1319 = vmatpush1.msra.mxu0 0.0
    %1320 = vmatprep.subr.mxu0 0.0
    %1321 = vmatpush1.msra.mxu0 0.0
    %1322 = vmatprep.subr.mxu0 0.0
    %1323 = vmatpush1.msra.mxu0 0.0
    %1324 = vmatprep.subr.mxu0 0.0
    %1325 = vmatpush1.msra.mxu0 0.0
    %1326 = vmatprep.mubr.f32.mxu0 0.0
    %1327 = vmatmul.mubr.f32.gmra.mrb[0].mxu0 %v1187
    %v1328 = vpop.f32.mrb[0].mxu0
    %v1329 = vadd.f32 0.0, %v1328
    %v1330 = vpop.f32.mrb[0].mxu0
    %1331 = vdwg.mxu0
    %v1332 = vadd.f32 %v1261, %v1329
    %v1333 = vmax.f32 %v1332, 0.0
    %v1335 = vsel %vm149, %v1260, 0
    %1337 = vmatprep.subr.mxu0 0.0
    %1338 = vmatpush1.msra.mxu0 %v51
    %1339 = vmatprep.subr.mxu0 0.0
    %1340 = vmatpush1.msra.mxu0 %v52
    %1341 = vmatprep.subr.mxu0 0.0
    %1342 = vmatpush1.msra.mxu0 %v53
    %1343 = vmatprep.subr.mxu0 0.0
    %1344 = vmatpush1.msra.mxu0 %v54
    %1345 = vmatprep.subr.mxu0 0.0
    %1346 = vmatpush1.msra.mxu0 0.0
    %1347 = vmatprep.subr.mxu0 0.0
    %1348 = vmatpush1.msra.mxu0 0.0
    %1349 = vmatprep.subr.mxu0 0.0
    %1350 = vmatpush1.msra.mxu0 0.0
    %1351 = vmatprep.subr.mxu0 0.0
    %1352 = vmatpush1.msra.mxu0 0.0
    %1353 = vmatprep.subr.mxu0 0.0
    %1354 = vmatpush1.msra.mxu0 0.0
    %1355 = vmatprep.subr.mxu0 0.0
    %1356 = vmatpush1.msra.mxu0 0.0
    %1357 = vmatprep.subr.mxu0 0.0
    %1358 = vmatpush1.msra.mxu0 0.0
    %1359 = vmatprep.subr.mxu0 0.0
    %1360 = vmatpush1.msra.mxu0 0.0
    %1361 = vmatprep.subr.mxu0 0.0
    %1362 = vmatpush1.msra.mxu0 0.0
    %1363 = vmatprep.subr.mxu0 0.0
    %1364 = vmatpush1.msra.mxu0 0.0
    %1365 = vmatprep.subr.mxu0 0.0
    %1366 = vmatpush1.msra.mxu0 0.0
    %1367 = vmatprep.subr.mxu0 0.0
    %1368 = vmatpush1.msra.mxu0 0.0
    %1369 = vmatprep.subr.mxu0 0.0
    %1370 = vmatpush1.msra.mxu0 0.0
    %1371 = vmatprep.subr.mxu0 0.0
    %1372 = vmatpush1.msra.mxu0 0.0
    %1373 = vmatprep.subr.mxu0 0.0
    %1374 = vmatpush1.msra.mxu0 0.0
    %1375 = vmatprep.subr.mxu0 0.0
    %1376 = vmatpush1.msra.mxu0 0.0
    %1377 = vmatprep.subr.mxu0 0.0
    %1378 = vmatpush1.msra.mxu0 0.0
    %1379 = vmatprep.subr.mxu0 0.0
    %1380 = vmatpush1.msra.mxu0 0.0
    %1381 = vmatprep.subr.mxu0 0.0
    %1382 = vmatpush1.msra.mxu0 0.0
    %1383 = vmatprep.subr.mxu0 0.0
    %1384 = vmatpush1.msra.mxu0 0.0
    %1385 = vmatprep.subr.mxu0 0.0
    %1386 = vmatpush1.msra.mxu0 0.0
    %1387 = vmatprep.subr.mxu0 0.0
    %1388 = vmatpush1.msra.mxu0 0.0
    %1389 = vmatprep.subr.mxu0 0.0
    %1390 = vmatpush1.msra.mxu0 0.0
    %1391 = vmatprep.subr.mxu0 0.0
    %1392 = vmatpush1.msra.mxu0 0.0
    %1393 = vmatprep.subr.mxu0 0.0
    %1394 = vmatpush1.msra.mxu0 0.0
    %1395 = vmatprep.subr.mxu0 0.0
    %1396 = vmatpush1.msra.mxu0 0.0
    %1397 = vmatprep.subr.mxu0 0.0
    %1398 = vmatpush1.msra.mxu0 0.0
    %1399 = vmatprep.subr.mxu0 0.0
    %1400 = vmatpush1.msra.mxu0 0.0
    %1401 = vmatprep.mubr.f32.mxu0 0.0
    %1402 = vmatmul.mubr.f32.gmra.mrb[0].mxu0 %v1335
    %v1403 = vpop.f32.mrb[0].mxu0
    %v1404 = vadd.f32 0.0, %v1403
    %v1405 = vpop.f32.mrb[0].mxu0
    %1406 = vdwg.mxu0
    %v1408 = vsel %vm149, %v1333, 0
    %1410 = vmatprep.subr.mxu0 0.0
    %1411 = vmatpush1.msra.mxu0 %v47
    %1412 = vmatprep.subr.mxu0 0.0
    %1413 = vmatpush1.msra.mxu0 %v48
    %1414 = vmatprep.subr.mxu0 0.0
    %1415 = vmatpush1.msra.mxu0 %v49
    %1416 = vmatprep.subr.mxu0 0.0
    %1417 = vmatpush1.msra.mxu0 %v50
    %1418 = vmatprep.subr.mxu0 0.0
    %1419 = vmatpush1.msra.mxu0 0.0
    %1420 = vmatprep.subr.mxu0 0.0
    %1421 = vmatpush1.msra.mxu0 0.0
    %1422 = vmatprep.subr.mxu0 0.0
    %1423 = vmatpush1.msra.mxu0 0.0
    %1424 = vmatprep.subr.mxu0 0.0
    %1425 = vmatpush1.msra.mxu0 0.0
    %1426 = vmatprep.subr.mxu0 0.0
    %1427 = vmatpush1.msra.mxu0 0.0
    %1428 = vmatprep.subr.mxu0 0.0
    %1429 = vmatpush1.msra.mxu0 0.0
    %1430 = vmatprep.subr.mxu0 0.0
    %1431 = vmatpush1.msra.mxu0 0.0
    %1432 = vmatprep.subr.mxu0 0.0
    %1433 = vmatpush1.msra.mxu0 0.0
    %1434 = vmatprep.subr.mxu0 0.0
    %1435 = vmatpush1.msra.mxu0 0.0
    %1436 = vmatprep.subr.mxu0 0.0
    %1437 = vmatpush1.msra.mxu0 0.0
    %1438 = vmatprep.subr.mxu0 0.0
    %1439 = vmatpush1.msra.mxu0 0.0
    %1440 = vmatprep.subr.mxu0 0.0
    %1441 = vmatpush1.msra.mxu0 0.0
    %1442 = vmatprep.subr.mxu0 0.0
    %1443 = vmatpush1.msra.mxu0 0.0
    %1444 = vmatprep.subr.mxu0 0.0
    %1445 = vmatpush1.msra.mxu0 0.0
    %1446 = vmatprep.subr.mxu0 0.0
    %1447 = vmatpush1.msra.mxu0 0.0
    %1448 = vmatprep.subr.mxu0 0.0
    %1449 = vmatpush1.msra.mxu0 0.0
    %1450 = vmatprep.subr.mxu0 0.0
    %1451 = vmatpush1.msra.mxu0 0.0
    %1452 = vmatprep.subr.mxu0 0.0
    %1453 = vmatpush1.msra.mxu0 0.0
    %1454 = vmatprep.subr.mxu0 0.0
    %1455 = vmatpush1.msra.mxu0 0.0
    %1456 = vmatprep.subr.mxu0 0.0
    %1457 = vmatpush1.msra.mxu0 0.0
    %1458 = vmatprep.subr.mxu0 0.0
    %1459 = vmatpush1.msra.mxu0 0.0
    %1460 = vmatprep.subr.mxu0 0.0
    %1461 = vmatpush1.msra.mxu0 0.0
    %1462 = vmatprep.subr.mxu0 0.0
    %1463 = vmatpush1.msra.mxu0 0.0
    %1464 = vmatprep.subr.mxu0 0.0
    %1465 = vmatpush1.msra.mxu0 0.0
    %1466 = vmatprep.subr.mxu0 0.0
    %1467 = vmatpush1.msra.mxu0 0.0
    %1468 = vmatprep.subr.mxu0 0.0
    %1469 = vmatpush1.msra.mxu0 0.0
    %1470 = vmatprep.subr.mxu0 0.0
    %1471 = vmatpush1.msra.mxu0 0.0
    %1472 = vmatprep.subr.mxu0 0.0
    %1473 = vmatpush1.msra.mxu0 0.0
    %1474 = vmatprep.mubr.f32.mxu0 0.0
    %1475 = vmatmul.mubr.f32.gmra.mrb[0].mxu0 %v1408
    %v1476 = vpop.f32.mrb[0].mxu0
    %v1477 = vadd.f32 %v1404, %v1476
    %v1478 = vpop.f32.mrb[0].mxu0
    %1479 = vdwg.mxu0
    %v1480 = vadd.f32 %v1477, %v374
    %v1481 = vmax.f32 %v1480, 0.0
    %v1482 = vld [vmem:[#allocation2 + $0xc] sm:$0x3]
    %1483 = vmatprep.subr.mxu0 0.0
    %1484 = vmatpush1.msra.mxu0 %v43
    %1485 = vmatprep.subr.mxu0 0.0
    %1486 = vmatpush1.msra.mxu0 %v44
    %1487 = vmatprep.subr.mxu0 0.0
    %1488 = vmatpush1.msra.mxu0 %v45
    %1489 = vmatprep.subr.mxu0 0.0
    %1490 = vmatpush1.msra.mxu0 %v46
    %1491 = vmatprep.subr.mxu0 0.0
    %1492 = vmatpush1.msra.mxu0 0.0
    %1493 = vmatprep.subr.mxu0 0.0
    %1494 = vmatpush1.msra.mxu0 0.0
    %1495 = vmatprep.subr.mxu0 0.0
    %1496 = vmatpush1.msra.mxu0 0.0
    %1497 = vmatprep.subr.mxu0 0.0
    %1498 = vmatpush1.msra.mxu0 0.0
    %1499 = vmatprep.subr.mxu0 0.0
    %1500 = vmatpush1.msra.mxu0 0.0
    %1501 = vmatprep.subr.mxu0 0.0
    %1502 = vmatpush1.msra.mxu0 0.0
    %1503 = vmatprep.subr.mxu0 0.0
    %1504 = vmatpush1.msra.mxu0 0.0
    %1505 = vmatprep.subr.mxu0 0.0
    %1506 = vmatpush1.msra.mxu0 0.0
    %1507 = vmatprep.subr.mxu0 0.0
    %1508 = vmatpush1.msra.mxu0 0.0
    %1509 = vmatprep.subr.mxu0 0.0
    %1510 = vmatpush1.msra.mxu0 0.0
    %1511 = vmatprep.subr.mxu0 0.0
    %1512 = vmatpush1.msra.mxu0 0.0
    %1513 = vmatprep.subr.mxu0 0.0
    %1514 = vmatpush1.msra.mxu0 0.0
    %1515 = vmatprep.subr.mxu0 0.0
    %1516 = vmatpush1.msra.mxu0 0.0
    %1517 = vmatprep.subr.mxu0 0.0
    %1518 = vmatpush1.msra.mxu0 0.0
    %1519 = vmatprep.subr.mxu0 0.0
    %1520 = vmatpush1.msra.mxu0 0.0
    %1521 = vmatprep.subr.mxu0 0.0
    %1522 = vmatpush1.msra.mxu0 0.0
    %1523 = vmatprep.subr.mxu0 0.0
    %1524 = vmatpush1.msra.mxu0 0.0
    %1525 = vmatprep.subr.mxu0 0.0
    %1526 = vmatpush1.msra.mxu0 0.0
    %1527 = vmatprep.subr.mxu0 0.0
    %1528 = vmatpush1.msra.mxu0 0.0
    %1529 = vmatprep.subr.mxu0 0.0
    %1530 = vmatpush1.msra.mxu0 0.0
    %1531 = vmatprep.subr.mxu0 0.0
    %1532 = vmatpush1.msra.mxu0 0.0
    %1533 = vmatprep.subr.mxu0 0.0
    %1534 = vmatpush1.msra.mxu0 0.0
    %1535 = vmatprep.subr.mxu0 0.0
    %1536 = vmatpush1.msra.mxu0 0.0
    %1537 = vmatprep.subr.mxu0 0.0
    %1538 = vmatpush1.msra.mxu0 0.0
    %1539 = vmatprep.subr.mxu0 0.0
    %1540 = vmatpush1.msra.mxu0 0.0
    %1541 = vmatprep.subr.mxu0 0.0
    %1542 = vmatpush1.msra.mxu0 0.0
    %1543 = vmatprep.subr.mxu0 0.0
    %1544 = vmatpush1.msra.mxu0 0.0
    %1545 = vmatprep.subr.mxu0 0.0
    %1546 = vmatpush1.msra.mxu0 0.0
    %1547 = vmatprep.mubr.f32.mxu0 0.0
    %1548 = vmatmul.mubr.f32.gmra.mrb[0].mxu0 %v1408
    %v1549 = vpop.f32.mrb[0].mxu0
    %v1550 = vadd.f32 0.0, %v1549
    %v1551 = vpop.f32.mrb[0].mxu0
    %1552 = vdwg.mxu0
    %v1553 = vadd.f32 %v1482, %v1550
    %v1554 = vmax.f32 %v1553, 0.0
    %v1556 = vsel %vm149, %v1481, 0
    %1558 = vmatprep.subr.mxu0 0.0
    %1559 = vmatpush1.msra.mxu0 %v51
    %1560 = vmatprep.subr.mxu0 0.0
    %1561 = vmatpush1.msra.mxu0 %v52
    %1562 = vmatprep.subr.mxu0 0.0
    %1563 = vmatpush1.msra.mxu0 %v53
    %1564 = vmatprep.subr.mxu0 0.0
    %1565 = vmatpush1.msra.mxu0 %v54
    %1566 = vmatprep.subr.mxu0 0.0
    %1567 = vmatpush1.msra.mxu0 0.0
    %1568 = vmatprep.subr.mxu0 0.0
    %1569 = vmatpush1.msra.mxu0 0.0
    %1570 = vmatprep.subr.mxu0 0.0
    %1571 = vmatpush1.msra.mxu0 0.0
    %1572 = vmatprep.subr.mxu0 0.0
    %1573 = vmatpush1.msra.mxu0 0.0
    %1574 = vmatprep.subr.mxu0 0.0
    %1575 = vmatpush1.msra.mxu0 0.0
    %1576 = vmatprep.subr.mxu0 0.0
    %1577 = vmatpush1.msra.mxu0 0.0
    %1578 = vmatprep.subr.mxu0 0.0
    %1579 = vmatpush1.msra.mxu0 0.0
    %1580 = vmatprep.subr.mxu0 0.0
    %1581 = vmatpush1.msra.mxu0 0.0
    %1582 = vmatprep.subr.mxu0 0.0
    %1583 = vmatpush1.msra.mxu0 0.0
    %1584 = vmatprep.subr.mxu0 0.0
    %1585 = vmatpush1.msra.mxu0 0.0
    %1586 = vmatprep.subr.mxu0 0.0
    %1587 = vmatpush1.msra.mxu0 0.0
    %1588 = vmatprep.subr.mxu0 0.0
    %1589 = vmatpush1.msra.mxu0 0.0
    %1590 = vmatprep.subr.mxu0 0.0
    %1591 = vmatpush1.msra.mxu0 0.0
    %1592 = vmatprep.subr.mxu0 0.0
    %1593 = vmatpush1.msra.mxu0 0.0
    %1594 = vmatprep.subr.mxu0 0.0
    %1595 = vmatpush1.msra.mxu0 0.0
    %1596 = vmatprep.subr.mxu0 0.0
    %1597 = vmatpush1.msra.mxu0 0.0
    %1598 = vmatprep.subr.mxu0 0.0
    %1599 = vmatpush1.msra.mxu0 0.0
    %1600 = vmatprep.subr.mxu0 0.0
    %1601 = vmatpush1.msra.mxu0 0.0
    %1602 = vmatprep.subr.mxu0 0.0
    %1603 = vmatpush1.msra.mxu0 0.0
    %1604 = vmatprep.subr.mxu0 0.0
    %1605 = vmatpush1.msra.mxu0 0.0
    %1606 = vmatprep.subr.mxu0 0.0
    %1607 = vmatpush1.msra.mxu0 0.0
    %1608 = vmatprep.subr.mxu0 0.0
    %1609 = vmatpush1.msra.mxu0 0.0
    %1610 = vmatprep.subr.mxu0 0.0
    %1611 = vmatpush1.msra.mxu0 0.0
    %1612 = vmatprep.subr.mxu0 0.0
    %1613 = vmatpush1.msra.mxu0 0.0
    %1614 = vmatprep.subr.mxu0 0.0
    %1615 = vmatpush1.msra.mxu0 0.0
    %1616 = vmatprep.subr.mxu0 0.0
    %1617 = vmatpush1.msra.mxu0 0.0
    %1618 = vmatprep.subr.mxu0 0.0
    %1619 = vmatpush1.msra.mxu0 0.0
    %1620 = vmatprep.subr.mxu0 0.0
    %1621 = vmatpush1.msra.mxu0 0.0
    %1622 = vmatprep.mubr.f32.mxu0 0.0
    %1623 = vmatmul.mubr.f32.gmra.mrb[0].mxu0 %v1556
    %v1624 = vpop.f32.mrb[0].mxu0
    %v1625 = vadd.f32 0.0, %v1624
    %v1626 = vpop.f32.mrb[0].mxu0
    %1627 = vdwg.mxu0
    %v1629 = vsel %vm149, %v1554, 0
    %1631 = vmatprep.subr.mxu0 0.0
    %1632 = vmatpush1.msra.mxu0 %v47
    %1633 = vmatprep.subr.mxu0 0.0
    %1634 = vmatpush1.msra.mxu0 %v48
    %1635 = vmatprep.subr.mxu0 0.0
    %1636 = vmatpush1.msra.mxu0 %v49
    %1637 = vmatprep.subr.mxu0 0.0
    %1638 = vmatpush1.msra.mxu0 %v50
    %1639 = vmatprep.subr.mxu0 0.0
    %1640 = vmatpush1.msra.mxu0 0.0
    %1641 = vmatprep.subr.mxu0 0.0
    %1642 = vmatpush1.msra.mxu0 0.0
    %1643 = vmatprep.subr.mxu0 0.0
    %1644 = vmatpush1.msra.mxu0 0.0
    %1645 = vmatprep.subr.mxu0 0.0
    %1646 = vmatpush1.msra.mxu0 0.0
    %1647 = vmatprep.subr.mxu0 0.0
    %1648 = vmatpush1.msra.mxu0 0.0
    %1649 = vmatprep.subr.mxu0 0.0
    %1650 = vmatpush1.msra.mxu0 0.0
    %1651 = vmatprep.subr.mxu0 0.0
    %1652 = vmatpush1.msra.mxu0 0.0
    %1653 = vmatprep.subr.mxu0 0.0
    %1654 = vmatpush1.msra.mxu0 0.0
    %1655 = vmatprep.subr.mxu0 0.0
    %1656 = vmatpush1.msra.mxu0 0.0
    %1657 = vmatprep.subr.mxu0 0.0
    %1658 = vmatpush1.msra.mxu0 0.0
    %1659 = vmatprep.subr.mxu0 0.0
    %1660 = vmatpush1.msra.mxu0 0.0
    %1661 = vmatprep.subr.mxu0 0.0
    %1662 = vmatpush1.msra.mxu0 0.0
    %1663 = vmatprep.subr.mxu0 0.0
    %1664 = vmatpush1.msra.mxu0 0.0
    %1665 = vmatprep.subr.mxu0 0.0
    %1666 = vmatpush1.msra.mxu0 0.0
    %1667 = vmatprep.subr.mxu0 0.0
    %1668 = vmatpush1.msra.mxu0 0.0
    %1669 = vmatprep.subr.mxu0 0.0
    %1670 = vmatpush1.msra.mxu0 0.0
    %1671 = vmatprep.subr.mxu0 0.0
    %1672 = vmatpush1.msra.mxu0 0.0
    %1673 = vmatprep.subr.mxu0 0.0
    %1674 = vmatpush1.msra.mxu0 0.0
    %1675 = vmatprep.subr.mxu0 0.0
    %1676 = vmatpush1.msra.mxu0 0.0
    %1677 = vmatprep.subr.mxu0 0.0
    %1678 = vmatpush1.msra.mxu0 0.0
    %1679 = vmatprep.subr.mxu0 0.0
    %1680 = vmatpush1.msra.mxu0 0.0
    %1681 = vmatprep.subr.mxu0 0.0
    %1682 = vmatpush1.msra.mxu0 0.0
    %1683 = vmatprep.subr.mxu0 0.0
    %1684 = vmatpush1.msra.mxu0 0.0
    %1685 = vmatprep.subr.mxu0 0.0
    %1686 = vmatpush1.msra.mxu0 0.0
    %1687 = vmatprep.subr.mxu0 0.0
    %1688 = vmatpush1.msra.mxu0 0.0
    %1689 = vmatprep.subr.mxu0 0.0
    %1690 = vmatpush1.msra.mxu0 0.0
    %1691 = vmatprep.subr.mxu0 0.0
    %1692 = vmatpush1.msra.mxu0 0.0
    %1693 = vmatprep.subr.mxu0 0.0
    %1694 = vmatpush1.msra.mxu0 0.0
    %1695 = vmatprep.mubr.f32.mxu0 0.0
    %1696 = vmatmul.mubr.f32.gmra.mrb[0].mxu0 %v1629
    %v1697 = vpop.f32.mrb[0].mxu0
    %v1698 = vadd.f32 %v1625, %v1697
    %v1699 = vpop.f32.mrb[0].mxu0
    %1700 = vdwg.mxu0
    %v1701 = vadd.f32 %v1698, %v374
    %v1702 = vmax.f32 %v1701, 0.0
    %v1703 = vld [vmem:[#allocation2 + $0xe] sm:$0x3]
    %1704 = vmatprep.subr.mxu0 0.0
    %1705 = vmatpush1.msra.mxu0 %v43
    %1706 = vmatprep.subr.mxu0 0.0
    %1707 = vmatpush1.msra.mxu0 %v44
    %1708 = vmatprep.subr.mxu0 0.0
    %1709 = vmatpush1.msra.mxu0 %v45
    %1710 = vmatprep.subr.mxu0 0.0
    %1711 = vmatpush1.msra.mxu0 %v46
    %1712 = vmatprep.subr.mxu0 0.0
    %1713 = vmatpush1.msra.mxu0 0.0
    %1714 = vmatprep.subr.mxu0 0.0
    %1715 = vmatpush1.msra.mxu0 0.0
    %1716 = vmatprep.subr.mxu0 0.0
    %1717 = vmatpush1.msra.mxu0 0.0
    %1718 = vmatprep.subr.mxu0 0.0
    %1719 = vmatpush1.msra.mxu0 0.0
    %1720 = vmatprep.subr.mxu0 0.0
    %1721 = vmatpush1.msra.mxu0 0.0
    %1722 = vmatprep.subr.mxu0 0.0
    %1723 = vmatpush1.msra.mxu0 0.0
    %1724 = vmatprep.subr.mxu0 0.0
    %1725 = vmatpush1.msra.mxu0 0.0
    %1726 = vmatprep.subr.mxu0 0.0
    %1727 = vmatpush1.msra.mxu0 0.0
    %1728 = vmatprep.subr.mxu0 0.0
    %1729 = vmatpush1.msra.mxu0 0.0
    %1730 = vmatprep.subr.mxu0 0.0
    %1731 = vmatpush1.msra.mxu0 0.0
    %1732 = vmatprep.subr.mxu0 0.0
    %1733 = vmatpush1.msra.mxu0 0.0
    %1734 = vmatprep.subr.mxu0 0.0
    %1735 = vmatpush1.msra.mxu0 0.0
    %1736 = vmatprep.subr.mxu0 0.0
    %1737 = vmatpush1.msra.mxu0 0.0
    %1738 = vmatprep.subr.mxu0 0.0
    %1739 = vmatpush1.msra.mxu0 0.0
    %1740 = vmatprep.subr.mxu0 0.0
    %1741 = vmatpush1.msra.mxu0 0.0
    %1742 = vmatprep.subr.mxu0 0.0
    %1743 = vmatpush1.msra.mxu0 0.0
    %1744 = vmatprep.subr.mxu0 0.0
    %1745 = vmatpush1.msra.mxu0 0.0
    %1746 = vmatprep.subr.mxu0 0.0
    %1747 = vmatpush1.msra.mxu0 0.0
    %1748 = vmatprep.subr.mxu0 0.0
    %1749 = vmatpush1.msra.mxu0 0.0
    %1750 = vmatprep.subr.mxu0 0.0
    %1751 = vmatpush1.msra.mxu0 0.0
    %1752 = vmatprep.subr.mxu0 0.0
    %1753 = vmatpush1.msra.mxu0 0.0
    %1754 = vmatprep.subr.mxu0 0.0
    %1755 = vmatpush1.msra.mxu0 0.0
    %1756 = vmatprep.subr.mxu0 0.0
    %1757 = vmatpush1.msra.mxu0 0.0
    %1758 = vmatprep.subr.mxu0 0.0
    %1759 = vmatpush1.msra.mxu0 0.0
    %1760 = vmatprep.subr.mxu0 0.0
    %1761 = vmatpush1.msra.mxu0 0.0
    %1762 = vmatprep.subr.mxu0 0.0
    %1763 = vmatpush1.msra.mxu0 0.0
    %1764 = vmatprep.subr.mxu0 0.0
    %1765 = vmatpush1.msra.mxu0 0.0
    %1766 = vmatprep.subr.mxu0 0.0
    %1767 = vmatpush1.msra.mxu0 0.0
    %1768 = vmatprep.mubr.f32.mxu0 0.0
    %1769 = vmatmul.mubr.f32.gmra.mrb[0].mxu0 %v1629
    %v1770 = vpop.f32.mrb[0].mxu0
    %v1771 = vadd.f32 0.0, %v1770
    %v1772 = vpop.f32.mrb[0].mxu0
    %1773 = vdwg.mxu0
    %v1774 = vadd.f32 %v1703, %v1771
    %v1775 = vmax.f32 %v1774, 0.0
    %v1777 = vsel %vm149, %v1702, 0
    %1779 = vmatprep.subr.mxu0 0.0
    %1780 = vmatpush1.msra.mxu0 %v51
    %1781 = vmatprep.subr.mxu0 0.0
    %1782 = vmatpush1.msra.mxu0 %v52
    %1783 = vmatprep.subr.mxu0 0.0
    %1784 = vmatpush1.msra.mxu0 %v53
    %1785 = vmatprep.subr.mxu0 0.0
    %1786 = vmatpush1.msra.mxu0 %v54
    %1787 = vmatprep.subr.mxu0 0.0
    %1788 = vmatpush1.msra.mxu0 0.0
    %1789 = vmatprep.subr.mxu0 0.0
    %1790 = vmatpush1.msra.mxu0 0.0
    %1791 = vmatprep.subr.mxu0 0.0
    %1792 = vmatpush1.msra.mxu0 0.0
    %1793 = vmatprep.subr.mxu0 0.0
    %1794 = vmatpush1.msra.mxu0 0.0
    %1795 = vmatprep.subr.mxu0 0.0
    %1796 = vmatpush1.msra.mxu0 0.0
    %1797 = vmatprep.subr.mxu0 0.0
    %1798 = vmatpush1.msra.mxu0 0.0
    %1799 = vmatprep.subr.mxu0 0.0
    %1800 = vmatpush1.msra.mxu0 0.0
    %1801 = vmatprep.subr.mxu0 0.0
    %1802 = vmatpush1.msra.mxu0 0.0
    %1803 = vmatprep.subr.mxu0 0.0
    %1804 = vmatpush1.msra.mxu0 0.0
    %1805 = vmatprep.subr.mxu0 0.0
    %1806 = vmatpush1.msra.mxu0 0.0
    %1807 = vmatprep.subr.mxu0 0.0
    %1808 = vmatpush1.msra.mxu0 0.0
    %1809 = vmatprep.subr.mxu0 0.0
    %1810 = vmatpush1.msra.mxu0 0.0
    %1811 = vmatprep.subr.mxu0 0.0
    %1812 = vmatpush1.msra.mxu0 0.0
    %1813 = vmatprep.subr.mxu0 0.0
    %1814 = vmatpush1.msra.mxu0 0.0
    %1815 = vmatprep.subr.mxu0 0.0
    %1816 = vmatpush1.msra.mxu0 0.0
    %1817 = vmatprep.subr.mxu0 0.0
    %1818 = vmatpush1.msra.mxu0 0.0
    %1819 = vmatprep.subr.mxu0 0.0
    %1820 = vmatpush1.msra.mxu0 0.0
    %1821 = vmatprep.subr.mxu0 0.0
    %1822 = vmatpush1.msra.mxu0 0.0
    %1823 = vmatprep.subr.mxu0 0.0
    %1824 = vmatpush1.msra.mxu0 0.0
    %1825 = vmatprep.subr.mxu0 0.0
    %1826 = vmatpush1.msra.mxu0 0.0
    %1827 = vmatprep.subr.mxu0 0.0
    %1828 = vmatpush1.msra.mxu0 0.0
    %1829 = vmatprep.subr.mxu0 0.0
    %1830 = vmatpush1.msra.mxu0 0.0
    %1831 = vmatprep.subr.mxu0 0.0
    %1832 = vmatpush1.msra.mxu0 0.0
    %1833 = vmatprep.subr.mxu0 0.0
    %1834 = vmatpush1.msra.mxu0 0.0
    %1835 = vmatprep.subr.mxu0 0.0
    %1836 = vmatpush1.msra.mxu0 0.0
    %1837 = vmatprep.subr.mxu0 0.0
    %1838 = vmatpush1.msra.mxu0 0.0
    %1839 = vmatprep.subr.mxu0 0.0
    %1840 = vmatpush1.msra.mxu0 0.0
    %1841 = vmatprep.subr.mxu0 0.0
    %1842 = vmatpush1.msra.mxu0 0.0
    %1843 = vmatprep.mubr.f32.mxu0 0.0
    %1844 = vmatmul.mubr.f32.gmra.mrb[0].mxu0 %v1777
    %v1845 = vpop.f32.mrb[0].mxu0
    %v1846 = vadd.f32 0.0, %v1845
    %v1847 = vpop.f32.mrb[0].mxu0
    %1848 = vdwg.mxu0
    %v1850 = vsel %vm149, %v1775, 0
    %1852 = vmatprep.subr.mxu0 0.0
    %1853 = vmatpush1.msra.mxu0 %v47
    %1854 = vmatprep.subr.mxu0 0.0
    %1855 = vmatpush1.msra.mxu0 %v48
    %1856 = vmatprep.subr.mxu0 0.0
    %1857 = vmatpush1.msra.mxu0 %v49
    %1858 = vmatprep.subr.mxu0 0.0
    %1859 = vmatpush1.msra.mxu0 %v50
    %1860 = vmatprep.subr.mxu0 0.0
    %1861 = vmatpush1.msra.mxu0 0.0
    %1862 = vmatprep.subr.mxu0 0.0
    %1863 = vmatpush1.msra.mxu0 0.0
    %1864 = vmatprep.subr.mxu0 0.0
    %1865 = vmatpush1.msra.mxu0 0.0
    %1866 = vmatprep.subr.mxu0 0.0
    %1867 = vmatpush1.msra.mxu0 0.0
    %1868 = vmatprep.subr.mxu0 0.0
    %1869 = vmatpush1.msra.mxu0 0.0
    %1870 = vmatprep.subr.mxu0 0.0
    %1871 = vmatpush1.msra.mxu0 0.0
    %1872 = vmatprep.subr.mxu0 0.0
    %1873 = vmatpush1.msra.mxu0 0.0
    %1874 = vmatprep.subr.mxu0 0.0
    %1875 = vmatpush1.msra.mxu0 0.0
    %1876 = vmatprep.subr.mxu0 0.0
    %1877 = vmatpush1.msra.mxu0 0.0
    %1878 = vmatprep.subr.mxu0 0.0
    %1879 = vmatpush1.msra.mxu0 0.0
    %1880 = vmatprep.subr.mxu0 0.0
    %1881 = vmatpush1.msra.mxu0 0.0
    %1882 = vmatprep.subr.mxu0 0.0
    %1883 = vmatpush1.msra.mxu0 0.0
    %1884 = vmatprep.subr.mxu0 0.0
    %1885 = vmatpush1.msra.mxu0 0.0
    %1886 = vmatprep.subr.mxu0 0.0
    %1887 = vmatpush1.msra.mxu0 0.0
    %1888 = vmatprep.subr.mxu0 0.0
    %1889 = vmatpush1.msra.mxu0 0.0
    %1890 = vmatprep.subr.mxu0 0.0
    %1891 = vmatpush1.msra.mxu0 0.0
    %1892 = vmatprep.subr.mxu0 0.0
    %1893 = vmatpush1.msra.mxu0 0.0
    %1894 = vmatprep.subr.mxu0 0.0
    %1895 = vmatpush1.msra.mxu0 0.0
    %1896 = vmatprep.subr.mxu0 0.0
    %1897 = vmatpush1.msra.mxu0 0.0
    %1898 = vmatprep.subr.mxu0 0.0
    %1899 = vmatpush1.msra.mxu0 0.0
    %1900 = vmatprep.subr.mxu0 0.0
    %1901 = vmatpush1.msra.mxu0 0.0
    %1902 = vmatprep.subr.mxu0 0.0
    %1903 = vmatpush1.msra.mxu0 0.0
    %1904 = vmatprep.subr.mxu0 0.0
    %1905 = vmatpush1.msra.mxu0 0.0
    %1906 = vmatprep.subr.mxu0 0.0
    %1907 = vmatpush1.msra.mxu0 0.0
    %1908 = vmatprep.subr.mxu0 0.0
    %1909 = vmatpush1.msra.mxu0 0.0
    %1910 = vmatprep.subr.mxu0 0.0
    %1911 = vmatpush1.msra.mxu0 0.0
    %1912 = vmatprep.subr.mxu0 0.0
    %1913 = vmatpush1.msra.mxu0 0.0
    %1914 = vmatprep.subr.mxu0 0.0
    %1915 = vmatpush1.msra.mxu0 0.0
    %1916 = vmatprep.mubr.f32.mxu0 0.0
    %1917 = vmatmul.mubr.f32.gmra.mrb[0].mxu0 %v1850
    %v1918 = vpop.f32.mrb[0].mxu0
    %v1919 = vadd.f32 %v1846, %v1918
    %v1920 = vpop.f32.mrb[0].mxu0
    %1921 = vdwg.mxu0
    %v1922 = vadd.f32 %v1919, %v374
    %v1923 = vmax.f32 %v1922, 0.0
    %v1924 = vrot.slane %v597, 6
    %v1926 = vrot.slane %v818, 4
    %v1928 = vrot.slane %v1039, 2
    %v1930 = vrot.slane %v1481, 6
    %v1932 = vrot.slane %v1702, 4
    %v1935 = vrot.slane %v1923, 2
    %vm1937 = vcmask 1041408
    %v1938 = vsel %vm1937, %v376, %v1924
    %vm1939 = vcmask 1043456
    %v1940 = vsel %vm1939, %v1938, %v1926
    %vm1941 = vcmask 1045504
    %v1942 = vsel %vm1941, %v1940, %v1928
    %v1943 = vsel %vm1937, %v1260, %v1930
    %v1944 = vsel %vm1939, %v1943, %v1932
    %v1945 = vsel %vm1941, %v1944, %v1935
    %v1946 = vlaneseq
    %v1947 = vshrl.u32 %v1946, 7
    %v1948 = vsub.s32 0, %v1947
    %v1949 = vrot.slane %v60, %v1948
    %v1951 = vsel %vm149, %v1942, 0
    %v1954 = vsel %vm149, %v1945, 0
    %1956 = vmatprep.subr.mxu0 0.0
    %1957 = vmatpush1.msra.mxu0 %v56
    %1958 = vmatprep.subr.mxu0 0.0
    %1959 = vmatpush1.msra.mxu0 %v57
    %1960 = vmatprep.subr.mxu0 0.0
    %1961 = vmatpush1.msra.mxu0 %v58
    %1962 = vmatprep.subr.mxu0 0.0
    %1963 = vmatpush1.msra.mxu0 %v59
    %1964 = vmatprep.subr.mxu0 0.0
    %1965 = vmatpush1.msra.mxu0 0.0
    %1966 = vmatprep.subr.mxu0 0.0
    %1967 = vmatpush1.msra.mxu0 0.0
    %1968 = vmatprep.subr.mxu0 0.0
    %1969 = vmatpush1.msra.mxu0 0.0
    %1970 = vmatprep.subr.mxu0 0.0
    %1971 = vmatpush1.msra.mxu0 0.0
    %1972 = vmatprep.subr.mxu0 0.0
    %1973 = vmatpush1.msra.mxu0 0.0
    %1974 = vmatprep.subr.mxu0 0.0
    %1975 = vmatpush1.msra.mxu0 0.0
    %1976 = vmatprep.subr.mxu0 0.0
    %1977 = vmatpush1.msra.mxu0 0.0
    %1978 = vmatprep.subr.mxu0 0.0
    %1979 = vmatpush1.msra.mxu0 0.0
    %1980 = vmatprep.subr.mxu0 0.0
    %1981 = vmatpush1.msra.mxu0 0.0
    %1982 = vmatprep.subr.mxu0 0.0
    %1983 = vmatpush1.msra.mxu0 0.0
    %1984 = vmatprep.subr.mxu0 0.0
    %1985 = vmatpush1.msra.mxu0 0.0
    %1986 = vmatprep.subr.mxu0 0.0
    %1987 = vmatpush1.msra.mxu0 0.0
    %1988 = vmatprep.subr.mxu0 0.0
    %1989 = vmatpush1.msra.mxu0 0.0
    %1990 = vmatprep.subr.mxu0 0.0
    %1991 = vmatpush1.msra.mxu0 0.0
    %1992 = vmatprep.subr.mxu0 0.0
    %1993 = vmatpush1.msra.mxu0 0.0
    %1994 = vmatprep.subr.mxu0 0.0
    %1995 = vmatpush1.msra.mxu0 0.0
    %1996 = vmatprep.subr.mxu0 0.0
    %1997 = vmatpush1.msra.mxu0 0.0
    %1998 = vmatprep.subr.mxu0 0.0
    %1999 = vmatpush1.msra.mxu0 0.0
    %2000 = vmatprep.subr.mxu0 0.0
    %2001 = vmatpush1.msra.mxu0 0.0
    %2002 = vmatprep.subr.mxu0 0.0
    %2003 = vmatpush1.msra.mxu0 0.0
    %2004 = vmatprep.subr.mxu0 0.0
    %2005 = vmatpush1.msra.mxu0 0.0
    %2006 = vmatprep.subr.mxu0 0.0
    %2007 = vmatpush1.msra.mxu0 0.0
    %2008 = vmatprep.subr.mxu0 0.0
    %2009 = vmatpush1.msra.mxu0 0.0
    %2010 = vmatprep.subr.mxu0 0.0
    %2011 = vmatpush1.msra.mxu0 0.0
    %2012 = vmatprep.subr.mxu0 0.0
    %2013 = vmatpush1.msra.mxu0 0.0
    %2014 = vmatprep.subr.mxu0 0.0
    %2015 = vmatpush1.msra.mxu0 0.0
    %2016 = vmatprep.subr.mxu0 0.0
    %2017 = vmatpush1.msra.mxu0 0.0
    %2018 = vmatprep.subr.mxu0 0.0
    %2019 = vmatpush1.msra.mxu0 0.0
    %2020 = vmatprep.mubr.f32.mxu0 0.0
    %2021 = vmatmul.mubr.f32.gmra.mrb[0].mxu0 %v1951
    %v2022 = vpop.f32.mrb[0].mxu0
    %v2023 = vadd.f32 %v1949, %v2022
    %v2024 = vpop.f32.mrb[0].mxu0
    %2025 = vmatprep.mubr.f32.mxu0 0.0
    %2026 = vmatmul.mubr.f32.gmra.mrb[0].mxu0 %v1954
    %v2027 = vpop.f32.mrb[0].mxu0
    %v2028 = vadd.f32 %v1949, %v2027
    %v2029 = vpop.f32.mrb[0].mxu0
    %2030 = vdwg.mxu0
    %2031 = vst.msk [vmem:[#allocation8] sm:$0xff] %vm67, %v2023
    %2032 = vst.msk [vmem:[#allocation8 + $0x8] sm:$0xff] %vm67, %v2028
    // Predicated region
    $region18: #{tpu_custom_call.1} parent=1 // pred_check
      _
    $region19: #{tpu_custom_call.1} parent=1 // pred_check_branch
      %2034 = sbr.rel (0) target = $region21
    $region20: #{tpu_custom_call.1} parent=1 // pred_region
      %s2036 = ssub.s32 256, 256
      %2037 = vsyncadd [#allocation5], %s2036
      %s2038 = sshll.u32 [#allocation8], 4
      %s2039 = int_to_ptr.vmem [resolvable:$true] %s2038
      %2044 = dma.vmem_to_hbm [thread:$0]  %s2039, 256, %s2, [#allocation5], 128, 128, 8
    $region21: #{tpu_custom_call.1} parent=1 // pred_fallthru
      _
    // Predicated region
    $region22: #{tpu_custom_call.1} parent=1 // pred_check
      _
    $region23: #{tpu_custom_call.1} parent=1 // pred_check_branch
      %2046 = sbr.rel (0) target = $region25
    $region24: #{tpu_custom_call.1} parent=1 // pred_region
      %2047 = dma.done [#allocation5], 256
    $region25: #{tpu_custom_call.1} parent=1 // pred_fallthru
      _
    %2048 = vsyncpa [#allocation4], 1
    %2049 = vsyncpa [#allocation7], 1
    %2050 = vsyncpa [#allocation5], 1

</llo_original>
